<compile_context>
chip_gen: v7x
topology: tpu7x:2x2x1
jax: 0.10.0
libtpu: 0.0.40
codegen_flags: <defaults>
</compile_context>

<pallas_src>
import functools

import jax
import jax.numpy as jnp
from jax.experimental import pallas as pl
from jax.experimental.pallas import tpu as pltpu

EPS = 1e-5  # nn.LayerNorm default eps


def _vmem_limit_bytes():
    # Generation-aware VMEM budget: ~75% of physical VMEM (v7x: ~48 MiB, v5e/v6e: ~96 MiB).
    try:
        return int(pltpu.get_tpu_info().vmem_capacity_bytes * 3 // 4)
    except Exception:
        return 48 * 1024 * 1024


# ------------------------------- fused kernel ------------------------------- #

def _layernorm(y, gamma, beta):
    mu = jnp.mean(y, axis=-1, keepdims=True)
    var = jnp.mean((y - mu) ** 2, axis=-1, keepdims=True)
    return (y - mu) * jax.lax.rsqrt(var + EPS) * gamma + beta


def _cross_layer_kernel(x1_ref, x2_ref, m1_ref, m2_ref,
                        wqkv_ref, bqkv_ref, fcw_ref, pd_ref,
                        w1_ref, b1_ref, w2_ref,
                        o1_ref, o2_ref, attn_ref,
                        *, n_head, d_k, d_v, inv_temp):
    # One batch element per grid step; both graphs processed together so the shared
    # projection / fc / FFN weights are loaded once and reused for all of it.
    x1 = x1_ref[0]                      # (L1, D)
    x2 = x2_ref[0]                      # (L2, D)
    m1 = m1_ref[0]                      # (L1, 1)
    m2 = m2_ref[0]                      # (L2, 1)

    w_qkv = wqkv_ref[...]               # (D, 3*H*d)  resident
    b_qkv = bqkv_ref[...]               # (1, 3*H*d)
    qkv1 = jnp.dot(x1, w_qkv, preferred_element_type=jnp.float32) + b_qkv   # (L1, 3*H*d)
    qkv2 = jnp.dot(x2, w_qkv, preferred_element_type=jnp.float32) + b_qkv   # (L2, 3*H*d)

    o_q = 0
    o_k = n_head * d_k
    o_v = 2 * n_head * d_k

    # TODO(synk): slf_attn_mask (additive masked_fill(-inf)) not applied; module default is None.
    heads1 = []   # per-head attention outputs for g1 queries (over g2 keys/values)
    heads2 = []   # per-head attention outputs for g2 queries (over g1 keys/values)
    for h in range(n_head):
        q1 = qkv1[:, o_q + h * d_k: o_q + (h + 1) * d_k] * inv_temp   # fold 1/temperature
        k1 = qkv1[:, o_k + h * d_k: o_k + (h + 1) * d_k]
        v1 = qkv1[:, o_v + h * d_v: o_v + (h + 1) * d_v]
        q2 = qkv2[:, o_q + h * d_k: o_q + (h + 1) * d_k] * inv_temp
        k2 = qkv2[:, o_k + h * d_k: o_k + (h + 1) * d_k]
        v2 = qkv2[:, o_v + h * d_v: o_v + (h + 1) * d_v]

        # g1 -> g2 direction: probabilities are a module output -> exact softmax divide.
        s12 = jax.lax.dot_general(q1, k2, (((1,), (1,)), ((), ())),
                                  preferred_element_type=jnp.float32)        # (L1, L2)
        s12 = s12 - jnp.max(s12, axis=-1, keepdims=True)
        e12 = jnp.exp(s12)
        p12 = e12 / jnp.sum(e12, axis=-1, keepdims=True)
        attn_ref[h, 0] = p12.astype(attn_ref.dtype)
        heads1.append(jnp.dot(p12, v2, preferred_element_type=jnp.float32))  # (L1, d_v)

        # g2 -> g1 direction: probabilities discarded by the module (no writeback).
        s21 = jax.lax.dot_general(q2, k1, (((1,), (1,)), ((), ())),
                                  preferred_element_type=jnp.float32)        # (L2, L1)
        s21 = s21 - jnp.max(s21, axis=-1, keepdims=True)
        e21 = jnp.exp(s21)
        p21 = e21 / jnp.sum(e21, axis=-1, keepdims=True)
        heads2.append(jnp.dot(p21, v1, preferred_element_type=jnp.float32))  # (L2, d_v)

    # Packed per-feature parameters: rows of (6, D).
    fc_b  = pd_ref[0:1]
    ln1_g = pd_ref[1:2]
    ln1_b = pd_ref[2:3]
    b2    = pd_ref[3:4]
    ln2_g = pd_ref[4:5]
    ln2_b = pd_ref[5:6]

    def tail(heads, x, m, out_ref):
        # fc over combined heads == sum of per-head contributions (no head concat,
        # straight to the MXU, lane-dense (L, D) result).
        y = fc_b
        for h in range(n_head):
            y = y + jnp.dot(heads[h], fcw_ref[h * d_v:(h + 1) * d_v, :],
                            preferred_element_type=jnp.float32)
        y = _layernorm(y + x, ln1_g, ln1_b) * m          # attention sub-layer + non_pad_mask
        hid = jnp.maximum(jnp.dot(y, w1_ref[...], preferred_element_type=jnp.float32)
                          + b1_ref[...], 0.0)            # Conv1d k=1 == per-token linear
        z = jnp.dot(hid, w2_ref[...], preferred_element_type=jnp.float32) + b2 + y
        out_ref[0] = (_layernorm(z, ln2_g, ln2_b) * m).astype(out_ref.dtype)

    tail(heads1, x1, m1, o1_ref)
    tail(heads2, x2, m2, o2_ref)


# --------------------------- module-level forward --------------------------- #

def init_params(key, d_model, d_inner, n_head, d_k, d_v):
    ks = jax.random.split(key, 6)

    def nrm(k, shape, std):
        return jax.random.normal(k, shape, jnp.float32) * std

    w_qs = nrm(ks[0], (d_model, n_head * d_k), (2.0 / (d_model + d_k)) ** 0.5)
    w_ks = nrm(ks[1], (d_model, n_head * d_k), (2.0 / (d_model + d_k)) ** 0.5)
    w_vs = nrm(ks[2], (d_model, n_head * d_v), (2.0 / (d_model + d_v)) ** 0.5)
    return {
        # fused [Q|K|V] projection weight (lane-dense 3*H*d output)
        "w_qkv": jnp.concatenate([w_qs, w_ks, w_vs], axis=1),
        "b_qkv": jnp.zeros((n_head * (2 * d_k + d_v),), jnp.float32),
        "fc_w": nrm(ks[3], (n_head * d_v, d_model), 0.05),
        "fc_b": jnp.zeros((d_model,), jnp.float32),
        "ln_attn_g": jnp.ones((d_model,), jnp.float32),
        "ln_attn_b": jnp.zeros((d_model,), jnp.float32),
        "ffn_w1": nrm(ks[4], (d_model, d_inner), 0.05),
        "ffn_b1": jnp.zeros((d_inner,), jnp.float32),
        "ffn_w2": nrm(ks[5], (d_inner, d_model), 0.05),
        "ffn_b2": jnp.zeros((d_model,), jnp.float32),
        "ln_ffn_g": jnp.ones((d_model,), jnp.float32),
        "ln_ffn_b": jnp.zeros((d_model,), jnp.float32),
    }


def cross_graph_encoder_layer(p, g1_out, g2_out, n_head, d_k, d_v,
                              non_pad_mask=(None, None), slf_attn_mask=(None, None)):
    # TODO(synk): slf_attn_mask is not applied (module default is None).
    # TODO(synk): dropout layers are identity (eval-mode forward).
    B, L1, D = g1_out.shape
    L2 = g2_out.shape[1]
    H = n_head
    P = p["w_qkv"].shape[1]
    d_inner = p["ffn_w1"].shape[1]

    m1 = (non_pad_mask[0] if non_pad_mask[0] is not None
          else jnp.ones((B, L1, 1), jnp.float32)).astype(jnp.float32).reshape(B, L1, 1)
    m2 = (non_pad_mask[1] if non_pad_mask[1] is not None
          else jnp.ones((B, L2, 1), jnp.float32)).astype(jnp.float32).reshape(B, L2, 1)

    # Pack the six (D,) per-feature parameter vectors into one (6, D) input.
    params_d = jnp.stack([p["fc_b"], p["ln_attn_g"], p["ln_attn_b"],
                          p["ffn_b2"], p["ln_ffn_g"], p["ln_ffn_b"]], axis=0)

    inv_temp = 1.0 / (float(d_k) ** 0.5)
    kernel = functools.partial(_cross_layer_kernel,
                               n_head=H, d_k=d_k, d_v=d_v, inv_temp=inv_temp)

    const2 = lambda b: (0, 0)
    batch3 = lambda b: (b, 0, 0)

    g1_new, g2_new, attn = pl.pallas_call(
        kernel,
        out_shape=(jax.ShapeDtypeStruct((B, L1, D), jnp.float32),
                   jax.ShapeDtypeStruct((B, L2, D), jnp.float32),
                   jax.ShapeDtypeStruct((H, B, L1, L2), jnp.float32)),
        grid=(B,),
        in_specs=[pl.BlockSpec((1, L1, D), batch3),          # x1 (per-batch block)
                  pl.BlockSpec((1, L2, D), batch3),          # x2
                  pl.BlockSpec((1, L1, 1), batch3),          # non_pad_mask 1
                  pl.BlockSpec((1, L2, 1), batch3),          # non_pad_mask 2
                  pl.BlockSpec((D, P), const2),              # w_qkv   (resident)
                  pl.BlockSpec((1, P), const2),              # b_qkv
                  pl.BlockSpec((H * d_v, D), const2),        # fc_w
                  pl.BlockSpec((6, D), const2),              # packed biases / LN params
                  pl.BlockSpec((D, d_inner), const2),        # ffn_w1
                  pl.BlockSpec((1, d_inner), const2),        # ffn_b1
                  pl.BlockSpec((d_inner, D), const2)],       # ffn_w2
        out_specs=(pl.BlockSpec((1, L1, D), batch3),
                   pl.BlockSpec((1, L2, D), batch3),
                   pl.BlockSpec((H, 1, L1, L2), lambda b: (0, b, 0, 0))),
        compiler_params=pltpu.CompilerParams(
            dimension_semantics=("parallel",),
            vmem_limit_bytes=_vmem_limit_bytes()),
    )(g1_out.astype(jnp.float32), g2_out.astype(jnp.float32), m1, m2,
      p["w_qkv"], p["b_qkv"].reshape(1, P), p["fc_w"], params_d,
      p["ffn_w1"], p["ffn_b1"].reshape(1, d_inner), p["ffn_w2"])

    # (H, B, L1, L2) -> (H*B, L1, L2) is a free reshape (head-major, matches PyTorch).
    return g1_new, g2_new, attn.reshape(H * B, L1, L2)


# ---------------------------------- main ----------------------------------- #

if __name__ == "__main__":
    B, L1, L2 = 2, 8, 8
    d_model, d_inner, n_head, d_k, d_v = 32, 64, 2, 16, 16

    key = jax.random.PRNGKey(0)
    k_param, k_g1, k_g2 = jax.random.split(key, 3)

    params = init_params(k_param, d_model, d_inner, n_head, d_k, d_v)
    g1 = jax.random.normal(k_g1, (B, L1, d_model), jnp.float32)
    g2 = jax.random.normal(k_g2, (B, L2, d_model), jnp.float32)

    # non_pad_mask: (B, L, 1); second batch element has its last two tokens padded.
    m1 = jnp.ones((B, L1, 1), jnp.float32).at[1, L1 - 2:, :].set(0.0)
    m2 = jnp.ones((B, L2, 1), jnp.float32).at[1, L2 - 2:, :].set(0.0)

    layer = jax.jit(functools.partial(cross_graph_encoder_layer,
                                      n_head=n_head, d_k=d_k, d_v=d_v))
    g1_out, g2_out, g1_g2_attn = layer(params, g1, g2, non_pad_mask=(m1, m2))

    jax.block_until_ready((g1_out, g2_out, g1_g2_attn))
    assert g1_out.shape == (B, L1, d_model)
    assert g2_out.shape == (B, L2, d_model)
    assert g1_g2_attn.shape == (n_head * B, L1, L2)
    print("KERNEL_OK")
</pallas_src>

<mosaic_0001>
module attributes {stable_mosaic.version = 11 : i64} {
  func.func @_cross_layer_kernel(%arg0: i32, %arg1: memref<1x8x32xf32, #tpu.memory_space<vmem>>, %arg2: memref<1x8x32xf32, #tpu.memory_space<vmem>>, %arg3: memref<1x8x1xf32, #tpu.memory_space<vmem>>, %arg4: memref<1x8x1xf32, #tpu.memory_space<vmem>>, %arg5: memref<32x96xf32, #tpu.memory_space<vmem>>, %arg6: memref<1x96xf32, #tpu.memory_space<vmem>>, %arg7: memref<32x32xf32, #tpu.memory_space<vmem>>, %arg8: memref<6x32xf32, #tpu.memory_space<vmem>>, %arg9: memref<32x64xf32, #tpu.memory_space<vmem>>, %arg10: memref<1x64xf32, #tpu.memory_space<vmem>>, %arg11: memref<64x32xf32, #tpu.memory_space<vmem>>, %arg12: memref<1x8x32xf32, #tpu.memory_space<vmem>>, %arg13: memref<1x8x32xf32, #tpu.memory_space<vmem>>, %arg14: memref<2x1x8x8xf32, #tpu.memory_space<vmem>>) attributes {dimension_semantics = [#tpu.dimension_semantics<parallel>], iteration_bounds = array<i64: 2>, scalar_prefetch = 0 : i64, scratch_operands = 0 : i64, tpu.core_type = #tpu.core_type<tc>, window_params = [{transform_indices = @transform_0, window_bounds = array<i64: 1, 8, 32>}, {transform_indices = @transform_1, window_bounds = array<i64: 1, 8, 32>}, {transform_indices = @transform_2, window_bounds = array<i64: 1, 8, 1>}, {transform_indices = @transform_3, window_bounds = array<i64: 1, 8, 1>}, {pipeline_mode = #tpu.pipeline_mode<synchronous>, transform_indices = @transform_4, window_bounds = array<i64: 32, 96>}, {pipeline_mode = #tpu.pipeline_mode<synchronous>, transform_indices = @transform_5, window_bounds = array<i64: 1, 96>}, {pipeline_mode = #tpu.pipeline_mode<synchronous>, transform_indices = @transform_6, window_bounds = array<i64: 32, 32>}, {pipeline_mode = #tpu.pipeline_mode<synchronous>, transform_indices = @transform_7, window_bounds = array<i64: 6, 32>}, {pipeline_mode = #tpu.pipeline_mode<synchronous>, transform_indices = @transform_8, window_bounds = array<i64: 32, 64>}, {pipeline_mode = #tpu.pipeline_mode<synchronous>, transform_indices = @transform_9, window_bounds = array<i64: 1, 64>}, {pipeline_mode = #tpu.pipeline_mode<synchronous>, transform_indices = @transform_10, window_bounds = array<i64: 64, 32>}, {transform_indices = @transform_11, window_bounds = array<i64: 1, 8, 32>}, {transform_indices = @transform_12, window_bounds = array<i64: 1, 8, 32>}, {transform_indices = @transform_13, window_bounds = array<i64: 2, 1, 8, 8>}]} {
    %c0 = arith.constant 0 : index
    %c0_0 = arith.constant 0 : index
    %c0_1 = arith.constant 0 : index
    %0 = vector.load %arg1[%c0, %c0_0, %c0_1] : memref<1x8x32xf32, #tpu.memory_space<vmem>>, vector<1x8x32xf32>
    %1 = vector.shape_cast %0 : vector<1x8x32xf32> to vector<8x32xf32>
    %c0_2 = arith.constant 0 : index
    %c0_3 = arith.constant 0 : index
    %c0_4 = arith.constant 0 : index
    %2 = vector.load %arg2[%c0_2, %c0_3, %c0_4] : memref<1x8x32xf32, #tpu.memory_space<vmem>>, vector<1x8x32xf32>
    %3 = vector.shape_cast %2 : vector<1x8x32xf32> to vector<8x32xf32>
    %c0_5 = arith.constant 0 : index
    %c0_6 = arith.constant 0 : index
    %c0_7 = arith.constant 0 : index
    %4 = vector.load %arg3[%c0_5, %c0_6, %c0_7] : memref<1x8x1xf32, #tpu.memory_space<vmem>>, vector<1x8x1xf32>
    %5 = vector.shape_cast %4 : vector<1x8x1xf32> to vector<8x1xf32>
    %c0_8 = arith.constant 0 : index
    %c0_9 = arith.constant 0 : index
    %c0_10 = arith.constant 0 : index
    %6 = vector.load %arg4[%c0_8, %c0_9, %c0_10] : memref<1x8x1xf32, #tpu.memory_space<vmem>>, vector<1x8x1xf32>
    %7 = vector.shape_cast %6 : vector<1x8x1xf32> to vector<8x1xf32>
    %c0_11 = arith.constant 0 : index
    %c0_12 = arith.constant 0 : index
    %8 = vector.load %arg5[%c0_11, %c0_12] : memref<32x96xf32, #tpu.memory_space<vmem>>, vector<32x96xf32>
    %c0_13 = arith.constant 0 : index
    %c0_14 = arith.constant 0 : index
    %9 = vector.load %arg6[%c0_13, %c0_14] : memref<1x96xf32, #tpu.memory_space<vmem>>, vector<1x96xf32>
    %cst = arith.constant dense<0.000000e+00> : vector<8x96xf32>
    %10 = tpu.matmul %1, %8, %cst {dimension_numbers = #tpu.dot_dimension_numbers<[1], [0], [0], [1], [0, 0, 1, 1], [], []>} : vector<8x32xf32>, vector<32x96xf32>, vector<8x96xf32> -> vector<8x96xf32>
    %11 = vector.broadcast %9 : vector<1x96xf32> to vector<8x96xf32>
    %12 = arith.addf %10, %11 : vector<8x96xf32>
    %cst_15 = arith.constant dense<0.000000e+00> : vector<8x96xf32>
    %13 = tpu.matmul %3, %8, %cst_15 {dimension_numbers = #tpu.dot_dimension_numbers<[1], [0], [0], [1], [0, 0, 1, 1], [], []>} : vector<8x32xf32>, vector<32x96xf32>, vector<8x96xf32> -> vector<8x96xf32>
    %14 = vector.broadcast %9 : vector<1x96xf32> to vector<8x96xf32>
    %15 = arith.addf %13, %14 : vector<8x96xf32>
    %16 = vector.extract_strided_slice %12 {offsets = [0, 0], sizes = [8, 16], strides = [1, 1]} : vector<8x96xf32> to vector<8x16xf32>
    %cst_16 = arith.constant 2.500000e-01 : f32
    %17 = vector.broadcast %cst_16 : f32 to vector<8x16xf32>
    %18 = arith.mulf %16, %17 : vector<8x16xf32>
    %19 = vector.extract_strided_slice %12 {offsets = [0, 32], sizes = [8, 16], strides = [1, 1]} : vector<8x96xf32> to vector<8x16xf32>
    %20 = vector.extract_strided_slice %12 {offsets = [0, 64], sizes = [8, 16], strides = [1, 1]} : vector<8x96xf32> to vector<8x16xf32>
    %21 = vector.extract_strided_slice %15 {offsets = [0, 0], sizes = [8, 16], strides = [1, 1]} : vector<8x96xf32> to vector<8x16xf32>
    %cst_17 = arith.constant 2.500000e-01 : f32
    %22 = vector.broadcast %cst_17 : f32 to vector<8x16xf32>
    %23 = arith.mulf %21, %22 : vector<8x16xf32>
    %24 = vector.extract_strided_slice %15 {offsets = [0, 32], sizes = [8, 16], strides = [1, 1]} : vector<8x96xf32> to vector<8x16xf32>
    %25 = vector.extract_strided_slice %15 {offsets = [0, 64], sizes = [8, 16], strides = [1, 1]} : vector<8x96xf32> to vector<8x16xf32>
    %cst_18 = arith.constant dense<0.000000e+00> : vector<8x8xf32>
    %26 = tpu.matmul %18, %24, %cst_18 {dimension_numbers = #tpu.dot_dimension_numbers<[1], [1], [0], [0], [0, 0, 1, 0], [], []>} : vector<8x16xf32>, vector<8x16xf32>, vector<8x8xf32> -> vector<8x8xf32>
    %cst_19 = arith.constant dense<0xFF800000> : vector<8xf32>
    %27 = vector.multi_reduction <maximumf>, %26, %cst_19 [1] : vector<8x8xf32> to vector<8xf32>
    %28 = vector.shape_cast %27 : vector<8xf32> to vector<8x1xf32>
    %29 = vector.broadcast %28 : vector<8x1xf32> to vector<8x8xf32>
    %30 = arith.subf %26, %29 : vector<8x8xf32>
    %31 = math.exp %30 : vector<8x8xf32>
    %cst_20 = arith.constant dense<0.000000e+00> : vector<8xf32>
    %32 = vector.multi_reduction <add>, %31, %cst_20 [1] : vector<8x8xf32> to vector<8xf32>
    %33 = vector.shape_cast %32 : vector<8xf32> to vector<8x1xf32>
    %34 = vector.broadcast %33 : vector<8x1xf32> to vector<8x8xf32>
    %35 = arith.divf %31, %34 : vector<8x8xf32>
    %c0_21 = arith.constant 0 : index
    %c0_22 = arith.constant 0 : index
    %c0_23 = arith.constant 0 : index
    %c0_24 = arith.constant 0 : index
    %36 = vector.load %arg14[%c0_21, %c0_22, %c0_23, %c0_24] : memref<2x1x8x8xf32, #tpu.memory_space<vmem>>, vector<1x1x8x8xf32>
    %37 = vector.shape_cast %36 : vector<1x1x8x8xf32> to vector<8x8xf32>
    %38 = vector.shape_cast %35 : vector<8x8xf32> to vector<1x1x8x8xf32>
    tpu.vector_store %arg14[%c0_21, %c0_22, %c0_23, %c0_24], %38 {strides = array<i32>} : memref<2x1x8x8xf32, #tpu.memory_space<vmem>>, vector<1x1x8x8xf32>,
    %cst_25 = arith.constant dense<0.000000e+00> : vector<8x16xf32>
    %39 = tpu.matmul %35, %25, %cst_25 {dimension_numbers = #tpu.dot_dimension_numbers<[1], [0], [0], [1], [0, 0, 1, 1], [], []>} : vector<8x8xf32>, vector<8x16xf32>, vector<8x16xf32> -> vector<8x16xf32>
    %cst_26 = arith.constant dense<0.000000e+00> : vector<8x8xf32>
    %40 = tpu.matmul %23, %19, %cst_26 {dimension_numbers = #tpu.dot_dimension_numbers<[1], [1], [0], [0], [0, 0, 1, 0], [], []>} : vector<8x16xf32>, vector<8x16xf32>, vector<8x8xf32> -> vector<8x8xf32>
    %cst_27 = arith.constant dense<0xFF800000> : vector<8xf32>
    %41 = vector.multi_reduction <maximumf>, %40, %cst_27 [1] : vector<8x8xf32> to vector<8xf32>
    %42 = vector.shape_cast %41 : vector<8xf32> to vector<8x1xf32>
    %43 = vector.broadcast %42 : vector<8x1xf32> to vector<8x8xf32>
    %44 = arith.subf %40, %43 : vector<8x8xf32>
    %45 = math.exp %44 : vector<8x8xf32>
    %cst_28 = arith.constant dense<0.000000e+00> : vector<8xf32>
    %46 = vector.multi_reduction <add>, %45, %cst_28 [1] : vector<8x8xf32> to vector<8xf32>
    %47 = vector.shape_cast %46 : vector<8xf32> to vector<8x1xf32>
    %48 = vector.broadcast %47 : vector<8x1xf32> to vector<8x8xf32>
    %49 = arith.divf %45, %48 : vector<8x8xf32>
    %cst_29 = arith.constant dense<0.000000e+00> : vector<8x16xf32>
    %50 = tpu.matmul %49, %20, %cst_29 {dimension_numbers = #tpu.dot_dimension_numbers<[1], [0], [0], [1], [0, 0, 1, 1], [], []>} : vector<8x8xf32>, vector<8x16xf32>, vector<8x16xf32> -> vector<8x16xf32>
    %51 = vector.extract_strided_slice %12 {offsets = [0, 16], sizes = [8, 16], strides = [1, 1]} : vector<8x96xf32> to vector<8x16xf32>
    %cst_30 = arith.constant 2.500000e-01 : f32
    %52 = vector.broadcast %cst_30 : f32 to vector<8x16xf32>
    %53 = arith.mulf %51, %52 : vector<8x16xf32>
    %54 = vector.extract_strided_slice %12 {offsets = [0, 48], sizes = [8, 16], strides = [1, 1]} : vector<8x96xf32> to vector<8x16xf32>
    %55 = vector.extract_strided_slice %12 {offsets = [0, 80], sizes = [8, 16], strides = [1, 1]} : vector<8x96xf32> to vector<8x16xf32>
    %56 = vector.extract_strided_slice %15 {offsets = [0, 16], sizes = [8, 16], strides = [1, 1]} : vector<8x96xf32> to vector<8x16xf32>
    %cst_31 = arith.constant 2.500000e-01 : f32
    %57 = vector.broadcast %cst_31 : f32 to vector<8x16xf32>
    %58 = arith.mulf %56, %57 : vector<8x16xf32>
    %59 = vector.extract_strided_slice %15 {offsets = [0, 48], sizes = [8, 16], strides = [1, 1]} : vector<8x96xf32> to vector<8x16xf32>
    %60 = vector.extract_strided_slice %15 {offsets = [0, 80], sizes = [8, 16], strides = [1, 1]} : vector<8x96xf32> to vector<8x16xf32>
    %cst_32 = arith.constant dense<0.000000e+00> : vector<8x8xf32>
    %61 = tpu.matmul %53, %59, %cst_32 {dimension_numbers = #tpu.dot_dimension_numbers<[1], [1], [0], [0], [0, 0, 1, 0], [], []>} : vector<8x16xf32>, vector<8x16xf32>, vector<8x8xf32> -> vector<8x8xf32>
    %cst_33 = arith.constant dense<0xFF800000> : vector<8xf32>
    %62 = vector.multi_reduction <maximumf>, %61, %cst_33 [1] : vector<8x8xf32> to vector<8xf32>
    %63 = vector.shape_cast %62 : vector<8xf32> to vector<8x1xf32>
    %64 = vector.broadcast %63 : vector<8x1xf32> to vector<8x8xf32>
    %65 = arith.subf %61, %64 : vector<8x8xf32>
    %66 = math.exp %65 : vector<8x8xf32>
    %cst_34 = arith.constant dense<0.000000e+00> : vector<8xf32>
    %67 = vector.multi_reduction <add>, %66, %cst_34 [1] : vector<8x8xf32> to vector<8xf32>
    %68 = vector.shape_cast %67 : vector<8xf32> to vector<8x1xf32>
    %69 = vector.broadcast %68 : vector<8x1xf32> to vector<8x8xf32>
    %70 = arith.divf %66, %69 : vector<8x8xf32>
    %c1 = arith.constant 1 : index
    %c0_35 = arith.constant 0 : index
    %c0_36 = arith.constant 0 : index
    %c0_37 = arith.constant 0 : index
    %71 = vector.load %arg14[%c1, %c0_35, %c0_36, %c0_37] : memref<2x1x8x8xf32, #tpu.memory_space<vmem>>, vector<1x1x8x8xf32>
    %72 = vector.shape_cast %71 : vector<1x1x8x8xf32> to vector<8x8xf32>
    %73 = vector.shape_cast %70 : vector<8x8xf32> to vector<1x1x8x8xf32>
    tpu.vector_store %arg14[%c1, %c0_35, %c0_36, %c0_37], %73 {strides = array<i32>} : memref<2x1x8x8xf32, #tpu.memory_space<vmem>>, vector<1x1x8x8xf32>,
    %cst_38 = arith.constant dense<0.000000e+00> : vector<8x16xf32>
    %74 = tpu.matmul %70, %60, %cst_38 {dimension_numbers = #tpu.dot_dimension_numbers<[1], [0], [0], [1], [0, 0, 1, 1], [], []>} : vector<8x8xf32>, vector<8x16xf32>, vector<8x16xf32> -> vector<8x16xf32>
    %cst_39 = arith.constant dense<0.000000e+00> : vector<8x8xf32>
    %75 = tpu.matmul %58, %54, %cst_39 {dimension_numbers = #tpu.dot_dimension_numbers<[1], [1], [0], [0], [0, 0, 1, 0], [], []>} : vector<8x16xf32>, vector<8x16xf32>, vector<8x8xf32> -> vector<8x8xf32>
    %cst_40 = arith.constant dense<0xFF800000> : vector<8xf32>
    %76 = vector.multi_reduction <maximumf>, %75, %cst_40 [1] : vector<8x8xf32> to vector<8xf32>
    %77 = vector.shape_cast %76 : vector<8xf32> to vector<8x1xf32>
    %78 = vector.broadcast %77 : vector<8x1xf32> to vector<8x8xf32>
    %79 = arith.subf %75, %78 : vector<8x8xf32>
    %80 = math.exp %79 : vector<8x8xf32>
    %cst_41 = arith.constant dense<0.000000e+00> : vector<8xf32>
    %81 = vector.multi_reduction <add>, %80, %cst_41 [1] : vector<8x8xf32> to vector<8xf32>
    %82 = vector.shape_cast %81 : vector<8xf32> to vector<8x1xf32>
    %83 = vector.broadcast %82 : vector<8x1xf32> to vector<8x8xf32>
    %84 = arith.divf %80, %83 : vector<8x8xf32>
    %cst_42 = arith.constant dense<0.000000e+00> : vector<8x16xf32>
    %85 = tpu.matmul %84, %55, %cst_42 {dimension_numbers = #tpu.dot_dimension_numbers<[1], [0], [0], [1], [0, 0, 1, 1], [], []>} : vector<8x8xf32>, vector<8x16xf32>, vector<8x16xf32> -> vector<8x16xf32>
    %c0_43 = arith.constant 0 : index
    %c0_44 = arith.constant 0 : index
    %86 = vector.load %arg8[%c0_43, %c0_44] : memref<6x32xf32, #tpu.memory_space<vmem>>, vector<1x32xf32>
    %c1_45 = arith.constant 1 : index
    %c0_46 = arith.constant 0 : index
    %87 = vector.load %arg8[%c1_45, %c0_46] : memref<6x32xf32, #tpu.memory_space<vmem>>, vector<1x32xf32>
    %c2 = arith.constant 2 : index
    %c0_47 = arith.constant 0 : index
    %88 = vector.load %arg8[%c2, %c0_47] : memref<6x32xf32, #tpu.memory_space<vmem>>, vector<1x32xf32>
    %c3 = arith.constant 3 : index
    %c0_48 = arith.constant 0 : index
    %89 = vector.load %arg8[%c3, %c0_48] : memref<6x32xf32, #tpu.memory_space<vmem>>, vector<1x32xf32>
    %c4 = arith.constant 4 : index
    %c0_49 = arith.constant 0 : index
    %90 = vector.load %arg8[%c4, %c0_49] : memref<6x32xf32, #tpu.memory_space<vmem>>, vector<1x32xf32>
    %c5 = arith.constant 5 : index
    %c0_50 = arith.constant 0 : index
    %91 = vector.load %arg8[%c5, %c0_50] : memref<6x32xf32, #tpu.memory_space<vmem>>, vector<1x32xf32>
    %c0_51 = arith.constant 0 : index
    %c0_52 = arith.constant 0 : index
    %92 = vector.load %arg7[%c0_51, %c0_52] : memref<32x32xf32, #tpu.memory_space<vmem>>, vector<16x32xf32>
    %cst_53 = arith.constant dense<0.000000e+00> : vector<8x32xf32>
    %93 = tpu.matmul %39, %92, %cst_53 {dimension_numbers = #tpu.dot_dimension_numbers<[1], [0], [0], [1], [0, 0, 1, 1], [], []>} : vector<8x16xf32>, vector<16x32xf32>, vector<8x32xf32> -> vector<8x32xf32>
    %94 = vector.broadcast %86 : vector<1x32xf32> to vector<8x32xf32>
    %95 = arith.addf %94, %93 : vector<8x32xf32>
    %c16 = arith.constant 16 : index
    %c0_54 = arith.constant 0 : index
    %96 = vector.load %arg7[%c16, %c0_54] : memref<32x32xf32, #tpu.memory_space<vmem>>, vector<16x32xf32>
    %cst_55 = arith.constant dense<0.000000e+00> : vector<8x32xf32>
    %97 = tpu.matmul %74, %96, %cst_55 {dimension_numbers = #tpu.dot_dimension_numbers<[1], [0], [0], [1], [0, 0, 1, 1], [], []>} : vector<8x16xf32>, vector<16x32xf32>, vector<8x32xf32> -> vector<8x32xf32>
    %98 = arith.addf %95, %97 : vector<8x32xf32>
    %99 = arith.addf %98, %1 : vector<8x32xf32>
    %cst_56 = arith.constant dense<0.000000e+00> : vector<8xf32>
    %100 = vector.multi_reduction <add>, %99, %cst_56 [1] : vector<8x32xf32> to vector<8xf32>
    %101 = vector.shape_cast %100 : vector<8xf32> to vector<8x1xf32>
    %cst_57 = arith.constant 3.200000e+01 : f32
    %102 = vector.broadcast %cst_57 : f32 to vector<8x1xf32>
    %103 = arith.divf %101, %102 : vector<8x1xf32>
    %104 = vector.broadcast %103 : vector<8x1xf32> to vector<8x32xf32>
    %105 = arith.subf %99, %104 : vector<8x32xf32>
    %106 = arith.mulf %105, %105 : vector<8x32xf32>
    %cst_58 = arith.constant dense<0.000000e+00> : vector<8xf32>
    %107 = vector.multi_reduction <add>, %106, %cst_58 [1] : vector<8x32xf32> to vector<8xf32>
    %108 = vector.shape_cast %107 : vector<8xf32> to vector<8x1xf32>
    %cst_59 = arith.constant 3.200000e+01 : f32
    %109 = vector.broadcast %cst_59 : f32 to vector<8x1xf32>
    %110 = arith.divf %108, %109 : vector<8x1xf32>
    %111 = vector.broadcast %103 : vector<8x1xf32> to vector<8x32xf32>
    %112 = arith.subf %99, %111 : vector<8x32xf32>
    %cst_60 = arith.constant 9.99999974E-6 : f32
    %113 = vector.broadcast %cst_60 : f32 to vector<8x1xf32>
    %114 = arith.addf %110, %113 : vector<8x1xf32>
    %115 = math.rsqrt %114 : vector<8x1xf32>
    %116 = vector.broadcast %115 : vector<8x1xf32> to vector<8x32xf32>
    %117 = arith.mulf %112, %116 : vector<8x32xf32>
    %118 = vector.broadcast %87 : vector<1x32xf32> to vector<8x32xf32>
    %119 = arith.mulf %117, %118 : vector<8x32xf32>
    %120 = vector.broadcast %88 : vector<1x32xf32> to vector<8x32xf32>
    %121 = arith.addf %119, %120 : vector<8x32xf32>
    %122 = vector.broadcast %5 : vector<8x1xf32> to vector<8x32xf32>
    %123 = arith.mulf %121, %122 : vector<8x32xf32>
    %c0_61 = arith.constant 0 : index
    %c0_62 = arith.constant 0 : index
    %124 = vector.load %arg9[%c0_61, %c0_62] : memref<32x64xf32, #tpu.memory_space<vmem>>, vector<32x64xf32>
    %cst_63 = arith.constant dense<0.000000e+00> : vector<8x64xf32>
    %125 = tpu.matmul %123, %124, %cst_63 {dimension_numbers = #tpu.dot_dimension_numbers<[1], [0], [0], [1], [0, 0, 1, 1], [], []>} : vector<8x32xf32>, vector<32x64xf32>, vector<8x64xf32> -> vector<8x64xf32>
    %c0_64 = arith.constant 0 : index
    %c0_65 = arith.constant 0 : index
    %126 = vector.load %arg10[%c0_64, %c0_65] : memref<1x64xf32, #tpu.memory_space<vmem>>, vector<1x64xf32>
    %127 = vector.broadcast %126 : vector<1x64xf32> to vector<8x64xf32>
    %128 = arith.addf %125, %127 : vector<8x64xf32>
    %cst_66 = arith.constant 0.000000e+00 : f32
    %129 = vector.broadcast %cst_66 : f32 to vector<8x64xf32>
    %130 = arith.maximumf %128, %129 : vector<8x64xf32>
    %c0_67 = arith.constant 0 : index
    %c0_68 = arith.constant 0 : index
    %131 = vector.load %arg11[%c0_67, %c0_68] : memref<64x32xf32, #tpu.memory_space<vmem>>, vector<64x32xf32>
    %cst_69 = arith.constant dense<0.000000e+00> : vector<8x32xf32>
    %132 = tpu.matmul %130, %131, %cst_69 {dimension_numbers = #tpu.dot_dimension_numbers<[1], [0], [0], [1], [0, 0, 1, 1], [], []>} : vector<8x64xf32>, vector<64x32xf32>, vector<8x32xf32> -> vector<8x32xf32>
    %133 = vector.broadcast %89 : vector<1x32xf32> to vector<8x32xf32>
    %134 = arith.addf %132, %133 : vector<8x32xf32>
    %135 = arith.addf %134, %123 : vector<8x32xf32>
    %cst_70 = arith.constant dense<0.000000e+00> : vector<8xf32>
    %136 = vector.multi_reduction <add>, %135, %cst_70 [1] : vector<8x32xf32> to vector<8xf32>
    %137 = vector.shape_cast %136 : vector<8xf32> to vector<8x1xf32>
    %cst_71 = arith.constant 3.200000e+01 : f32
    %138 = vector.broadcast %cst_71 : f32 to vector<8x1xf32>
    %139 = arith.divf %137, %138 : vector<8x1xf32>
    %140 = vector.broadcast %139 : vector<8x1xf32> to vector<8x32xf32>
    %141 = arith.subf %135, %140 : vector<8x32xf32>
    %142 = arith.mulf %141, %141 : vector<8x32xf32>
    %cst_72 = arith.constant dense<0.000000e+00> : vector<8xf32>
    %143 = vector.multi_reduction <add>, %142, %cst_72 [1] : vector<8x32xf32> to vector<8xf32>
    %144 = vector.shape_cast %143 : vector<8xf32> to vector<8x1xf32>
    %cst_73 = arith.constant 3.200000e+01 : f32
    %145 = vector.broadcast %cst_73 : f32 to vector<8x1xf32>
    %146 = arith.divf %144, %145 : vector<8x1xf32>
    %147 = vector.broadcast %139 : vector<8x1xf32> to vector<8x32xf32>
    %148 = arith.subf %135, %147 : vector<8x32xf32>
    %cst_74 = arith.constant 9.99999974E-6 : f32
    %149 = vector.broadcast %cst_74 : f32 to vector<8x1xf32>
    %150 = arith.addf %146, %149 : vector<8x1xf32>
    %151 = math.rsqrt %150 : vector<8x1xf32>
    %152 = vector.broadcast %151 : vector<8x1xf32> to vector<8x32xf32>
    %153 = arith.mulf %148, %152 : vector<8x32xf32>
    %154 = vector.broadcast %90 : vector<1x32xf32> to vector<8x32xf32>
    %155 = arith.mulf %153, %154 : vector<8x32xf32>
    %156 = vector.broadcast %91 : vector<1x32xf32> to vector<8x32xf32>
    %157 = arith.addf %155, %156 : vector<8x32xf32>
    %158 = vector.broadcast %5 : vector<8x1xf32> to vector<8x32xf32>
    %159 = arith.mulf %157, %158 : vector<8x32xf32>
    %c0_75 = arith.constant 0 : index
    %c0_76 = arith.constant 0 : index
    %c0_77 = arith.constant 0 : index
    %160 = vector.load %arg12[%c0_75, %c0_76, %c0_77] : memref<1x8x32xf32, #tpu.memory_space<vmem>>, vector<1x8x32xf32>
    %161 = vector.shape_cast %160 : vector<1x8x32xf32> to vector<8x32xf32>
    %162 = vector.shape_cast %159 : vector<8x32xf32> to vector<1x8x32xf32>
    tpu.vector_store %arg12[%c0_75, %c0_76, %c0_77], %162 {strides = array<i32>} : memref<1x8x32xf32, #tpu.memory_space<vmem>>, vector<1x8x32xf32>,
    %c0_78 = arith.constant 0 : index
    %c0_79 = arith.constant 0 : index
    %163 = vector.load %arg7[%c0_78, %c0_79] : memref<32x32xf32, #tpu.memory_space<vmem>>, vector<16x32xf32>
    %cst_80 = arith.constant dense<0.000000e+00> : vector<8x32xf32>
    %164 = tpu.matmul %50, %163, %cst_80 {dimension_numbers = #tpu.dot_dimension_numbers<[1], [0], [0], [1], [0, 0, 1, 1], [], []>} : vector<8x16xf32>, vector<16x32xf32>, vector<8x32xf32> -> vector<8x32xf32>
    %165 = vector.broadcast %86 : vector<1x32xf32> to vector<8x32xf32>
    %166 = arith.addf %165, %164 : vector<8x32xf32>
    %c16_81 = arith.constant 16 : index
    %c0_82 = arith.constant 0 : index
    %167 = vector.load %arg7[%c16_81, %c0_82] : memref<32x32xf32, #tpu.memory_space<vmem>>, vector<16x32xf32>
    %cst_83 = arith.constant dense<0.000000e+00> : vector<8x32xf32>
    %168 = tpu.matmul %85, %167, %cst_83 {dimension_numbers = #tpu.dot_dimension_numbers<[1], [0], [0], [1], [0, 0, 1, 1], [], []>} : vector<8x16xf32>, vector<16x32xf32>, vector<8x32xf32> -> vector<8x32xf32>
    %169 = arith.addf %166, %168 : vector<8x32xf32>
    %170 = arith.addf %169, %3 : vector<8x32xf32>
    %cst_84 = arith.constant dense<0.000000e+00> : vector<8xf32>
    %171 = vector.multi_reduction <add>, %170, %cst_84 [1] : vector<8x32xf32> to vector<8xf32>
    %172 = vector.shape_cast %171 : vector<8xf32> to vector<8x1xf32>
    %cst_85 = arith.constant 3.200000e+01 : f32
    %173 = vector.broadcast %cst_85 : f32 to vector<8x1xf32>
    %174 = arith.divf %172, %173 : vector<8x1xf32>
    %175 = vector.broadcast %174 : vector<8x1xf32> to vector<8x32xf32>
    %176 = arith.subf %170, %175 : vector<8x32xf32>
    %177 = arith.mulf %176, %176 : vector<8x32xf32>
    %cst_86 = arith.constant dense<0.000000e+00> : vector<8xf32>
    %178 = vector.multi_reduction <add>, %177, %cst_86 [1] : vector<8x32xf32> to vector<8xf32>
    %179 = vector.shape_cast %178 : vector<8xf32> to vector<8x1xf32>
    %cst_87 = arith.constant 3.200000e+01 : f32
    %180 = vector.broadcast %cst_87 : f32 to vector<8x1xf32>
    %181 = arith.divf %179, %180 : vector<8x1xf32>
    %182 = vector.broadcast %174 : vector<8x1xf32> to vector<8x32xf32>
    %183 = arith.subf %170, %182 : vector<8x32xf32>
    %cst_88 = arith.constant 9.99999974E-6 : f32
    %184 = vector.broadcast %cst_88 : f32 to vector<8x1xf32>
    %185 = arith.addf %181, %184 : vector<8x1xf32>
    %186 = math.rsqrt %185 : vector<8x1xf32>
    %187 = vector.broadcast %186 : vector<8x1xf32> to vector<8x32xf32>
    %188 = arith.mulf %183, %187 : vector<8x32xf32>
    %189 = vector.broadcast %87 : vector<1x32xf32> to vector<8x32xf32>
    %190 = arith.mulf %188, %189 : vector<8x32xf32>
    %191 = vector.broadcast %88 : vector<1x32xf32> to vector<8x32xf32>
    %192 = arith.addf %190, %191 : vector<8x32xf32>
    %193 = vector.broadcast %7 : vector<8x1xf32> to vector<8x32xf32>
    %194 = arith.mulf %192, %193 : vector<8x32xf32>
    %c0_89 = arith.constant 0 : index
    %c0_90 = arith.constant 0 : index
    %195 = vector.load %arg9[%c0_89, %c0_90] : memref<32x64xf32, #tpu.memory_space<vmem>>, vector<32x64xf32>
    %cst_91 = arith.constant dense<0.000000e+00> : vector<8x64xf32>
    %196 = tpu.matmul %194, %195, %cst_91 {dimension_numbers = #tpu.dot_dimension_numbers<[1], [0], [0], [1], [0, 0, 1, 1], [], []>} : vector<8x32xf32>, vector<32x64xf32>, vector<8x64xf32> -> vector<8x64xf32>
    %c0_92 = arith.constant 0 : index
    %c0_93 = arith.constant 0 : index
    %197 = vector.load %arg10[%c0_92, %c0_93] : memref<1x64xf32, #tpu.memory_space<vmem>>, vector<1x64xf32>
    %198 = vector.broadcast %197 : vector<1x64xf32> to vector<8x64xf32>
    %199 = arith.addf %196, %198 : vector<8x64xf32>
    %cst_94 = arith.constant 0.000000e+00 : f32
    %200 = vector.broadcast %cst_94 : f32 to vector<8x64xf32>
    %201 = arith.maximumf %199, %200 : vector<8x64xf32>
    %c0_95 = arith.constant 0 : index
    %c0_96 = arith.constant 0 : index
    %202 = vector.load %arg11[%c0_95, %c0_96] : memref<64x32xf32, #tpu.memory_space<vmem>>, vector<64x32xf32>
    %cst_97 = arith.constant dense<0.000000e+00> : vector<8x32xf32>
    %203 = tpu.matmul %201, %202, %cst_97 {dimension_numbers = #tpu.dot_dimension_numbers<[1], [0], [0], [1], [0, 0, 1, 1], [], []>} : vector<8x64xf32>, vector<64x32xf32>, vector<8x32xf32> -> vector<8x32xf32>
    %204 = vector.broadcast %89 : vector<1x32xf32> to vector<8x32xf32>
    %205 = arith.addf %203, %204 : vector<8x32xf32>
    %206 = arith.addf %205, %194 : vector<8x32xf32>
    %cst_98 = arith.constant dense<0.000000e+00> : vector<8xf32>
    %207 = vector.multi_reduction <add>, %206, %cst_98 [1] : vector<8x32xf32> to vector<8xf32>
    %208 = vector.shape_cast %207 : vector<8xf32> to vector<8x1xf32>
    %cst_99 = arith.constant 3.200000e+01 : f32
    %209 = vector.broadcast %cst_99 : f32 to vector<8x1xf32>
    %210 = arith.divf %208, %209 : vector<8x1xf32>
    %211 = vector.broadcast %210 : vector<8x1xf32> to vector<8x32xf32>
    %212 = arith.subf %206, %211 : vector<8x32xf32>
    %213 = arith.mulf %212, %212 : vector<8x32xf32>
    %cst_100 = arith.constant dense<0.000000e+00> : vector<8xf32>
    %214 = vector.multi_reduction <add>, %213, %cst_100 [1] : vector<8x32xf32> to vector<8xf32>
    %215 = vector.shape_cast %214 : vector<8xf32> to vector<8x1xf32>
    %cst_101 = arith.constant 3.200000e+01 : f32
    %216 = vector.broadcast %cst_101 : f32 to vector<8x1xf32>
    %217 = arith.divf %215, %216 : vector<8x1xf32>
    %218 = vector.broadcast %210 : vector<8x1xf32> to vector<8x32xf32>
    %219 = arith.subf %206, %218 : vector<8x32xf32>
    %cst_102 = arith.constant 9.99999974E-6 : f32
    %220 = vector.broadcast %cst_102 : f32 to vector<8x1xf32>
    %221 = arith.addf %217, %220 : vector<8x1xf32>
    %222 = math.rsqrt %221 : vector<8x1xf32>
    %223 = vector.broadcast %222 : vector<8x1xf32> to vector<8x32xf32>
    %224 = arith.mulf %219, %223 : vector<8x32xf32>
    %225 = vector.broadcast %90 : vector<1x32xf32> to vector<8x32xf32>
    %226 = arith.mulf %224, %225 : vector<8x32xf32>
    %227 = vector.broadcast %91 : vector<1x32xf32> to vector<8x32xf32>
    %228 = arith.addf %226, %227 : vector<8x32xf32>
    %229 = vector.broadcast %7 : vector<8x1xf32> to vector<8x32xf32>
    %230 = arith.mulf %228, %229 : vector<8x32xf32>
    %c0_103 = arith.constant 0 : index
    %c0_104 = arith.constant 0 : index
    %c0_105 = arith.constant 0 : index
    %231 = vector.load %arg13[%c0_103, %c0_104, %c0_105] : memref<1x8x32xf32, #tpu.memory_space<vmem>>, vector<1x8x32xf32>
    %232 = vector.shape_cast %231 : vector<1x8x32xf32> to vector<8x32xf32>
    %233 = vector.shape_cast %230 : vector<8x32xf32> to vector<1x8x32xf32>
    tpu.vector_store %arg13[%c0_103, %c0_104, %c0_105], %233 {strides = array<i32>} : memref<1x8x32xf32, #tpu.memory_space<vmem>>, vector<1x8x32xf32>,
    return
  }
  func.func @transform_0(%arg0: i32) -> (i32, i32, i32) {
    %c0_i32 = arith.constant 0 : i32
    %c0_i32_0 = arith.constant 0 : i32
    %c0_i32_1 = arith.constant 0 : i32
    return %arg0, %c0_i32, %c0_i32_0 : i32, i32, i32
  }
  func.func @transform_1(%arg0: i32) -> (i32, i32, i32) {
    %c0_i32 = arith.constant 0 : i32
    %c0_i32_0 = arith.constant 0 : i32
    %c0_i32_1 = arith.constant 0 : i32
    return %arg0, %c0_i32, %c0_i32_0 : i32, i32, i32
  }
  func.func @transform_2(%arg0: i32) -> (i32, i32, i32) {
    %c0_i32 = arith.constant 0 : i32
    %c0_i32_0 = arith.constant 0 : i32
    %c0_i32_1 = arith.constant 0 : i32
    return %arg0, %c0_i32, %c0_i32_0 : i32, i32, i32
  }
  func.func @transform_3(%arg0: i32) -> (i32, i32, i32) {
    %c0_i32 = arith.constant 0 : i32
    %c0_i32_0 = arith.constant 0 : i32
    %c0_i32_1 = arith.constant 0 : i32
    return %arg0, %c0_i32, %c0_i32_0 : i32, i32, i32
  }
  func.func @transform_4(%arg0: i32) -> (i32, i32) {
    %c0_i32 = arith.constant 0 : i32
    %c0_i32_0 = arith.constant 0 : i32
    %c0_i32_1 = arith.constant 0 : i32
    return %c0_i32, %c0_i32_0 : i32, i32
  }
  func.func @transform_5(%arg0: i32) -> (i32, i32) {
    %c0_i32 = arith.constant 0 : i32
    %c0_i32_0 = arith.constant 0 : i32
    %c0_i32_1 = arith.constant 0 : i32
    return %c0_i32, %c0_i32_0 : i32, i32
  }
  func.func @transform_6(%arg0: i32) -> (i32, i32) {
    %c0_i32 = arith.constant 0 : i32
    %c0_i32_0 = arith.constant 0 : i32
    %c0_i32_1 = arith.constant 0 : i32
    return %c0_i32, %c0_i32_0 : i32, i32
  }
  func.func @transform_7(%arg0: i32) -> (i32, i32) {
    %c0_i32 = arith.constant 0 : i32
    %c0_i32_0 = arith.constant 0 : i32
    %c0_i32_1 = arith.constant 0 : i32
    return %c0_i32, %c0_i32_0 : i32, i32
  }
  func.func @transform_8(%arg0: i32) -> (i32, i32) {
    %c0_i32 = arith.constant 0 : i32
    %c0_i32_0 = arith.constant 0 : i32
    %c0_i32_1 = arith.constant 0 : i32
    return %c0_i32, %c0_i32_0 : i32, i32
  }
  func.func @transform_9(%arg0: i32) -> (i32, i32) {
    %c0_i32 = arith.constant 0 : i32
    %c0_i32_0 = arith.constant 0 : i32
    %c0_i32_1 = arith.constant 0 : i32
    return %c0_i32, %c0_i32_0 : i32, i32
  }
  func.func @transform_10(%arg0: i32) -> (i32, i32) {
    %c0_i32 = arith.constant 0 : i32
    %c0_i32_0 = arith.constant 0 : i32
    %c0_i32_1 = arith.constant 0 : i32
    return %c0_i32, %c0_i32_0 : i32, i32
  }
  func.func @transform_11(%arg0: i32) -> (i32, i32, i32) {
    %c0_i32 = arith.constant 0 : i32
    %c0_i32_0 = arith.constant 0 : i32
    %c0_i32_1 = arith.constant 0 : i32
    return %arg0, %c0_i32, %c0_i32_0 : i32, i32, i32
  }
  func.func @transform_12(%arg0: i32) -> (i32, i32, i32) {
    %c0_i32 = arith.constant 0 : i32
    %c0_i32_0 = arith.constant 0 : i32
    %c0_i32_1 = arith.constant 0 : i32
    return %arg0, %c0_i32, %c0_i32_0 : i32, i32, i32
  }
  func.func @transform_13(%arg0: i32) -> (i32, i32, i32, i32) {
    %c0_i32 = arith.constant 0 : i32
    %c0_i32_0 = arith.constant 0 : i32
    %c0_i32_1 = arith.constant 0 : i32
    %c0_i32_2 = arith.constant 0 : i32
    return %c0_i32, %arg0, %c0_i32_0, %c0_i32_1 : i32, i32, i32, i32
  }
}

</mosaic_0001>

<llo_original>
// kernel: cross_graph_encoder_layer.1
$region0: #{cross_graph_encoder_layer.1}
  #allocation0 [shape = 'u32[]', space=smem, size = 0x4, offset = 0x4, fixed_abs, tag = 'smem constant byte address 0x4 - core index']
  #allocation1 [shape = 'u32[144,128]{1,0:T(1,128)}', space=vmem, size = 0x12000, scoped, tag = 'internal scratch']
  %s0 = inlined_call_operand.vmem [shape: f32[2,8,32], index: 0, kind: input, shape index: {}]
  %s1 = inlined_call_operand.vmem [shape: f32[2,8,32], index: 1, kind: input, shape index: {}]
  %s2 = inlined_call_operand.vmem [shape: f32[2,8,1], index: 2, kind: input, shape index: {}]
  %s3 = inlined_call_operand.vmem [shape: f32[2,8,1], index: 3, kind: input, shape index: {}]
  %s4 = inlined_call_operand.vmem [shape: f32[32,96], index: 4, kind: input, shape index: {}]
  %s5 = inlined_call_operand.vmem [shape: f32[1,96], index: 5, kind: input, shape index: {}]
  %s6 = inlined_call_operand.vmem [shape: f32[32,32], index: 6, kind: input, shape index: {}]
  %s7 = inlined_call_operand.vmem [shape: f32[6,32], index: 7, kind: input, shape index: {}]
  %s8 = inlined_call_operand.vmem [shape: f32[32,64], index: 8, kind: input, shape index: {}]
  %s9 = inlined_call_operand.vmem [shape: f32[1,64], index: 9, kind: input, shape index: {}]
  %s10 = inlined_call_operand.vmem [shape: f32[64,32], index: 10, kind: input, shape index: {}]
  %s11 = inlined_call_operand.hbm [shape: f32[2,8,32], index: 11, kind: output, shape index: {0}]
  %s12 = inlined_call_operand.hbm [shape: f32[2,8,32], index: 12, kind: output, shape index: {1}]
  %s13 = inlined_call_operand.hbm [shape: f32[2,2,8,8], index: 13, kind: output, shape index: {2}]
  %14 = xla_tuple %s11, %s12, %s13
  %s15 = sld [smem:[#allocation0]]
  $region93: #{cross_graph_encoder_layer.1} parent=0
    _
  %s17 = ssub.s32 1, %s15
  %s18 = scalar_select 0, %s17, %s15
  $region1: #{cross_graph_encoder_layer.1} parent=0
    #allocation2 [shape = 'u8[8192]{0}', space=vmem, size = 0x2000, scoped, tag = 'output window, operand 0']
    #allocation3 [shape = 's32[2]{0}', space=sflag, size = 0x8, scoped, tag = 'scoped memory for cross_graph_encoder_layer.1']
    #allocation4 [shape = 'u8[8192]{0}', space=vmem, size = 0x2000, scoped, tag = 'output window, operand 1']
    #allocation5 [shape = 's32[2]{0}', space=sflag, size = 0x8, scoped, tag = 'scoped memory for cross_graph_encoder_layer.1']
    #allocation6 [shape = 'u8[16384]{0}', space=vmem, size = 0x4000, scoped, tag = 'output window, operand 2']
    %19 = vsyncpa [#allocation3], 0
    %s20 = scalar_lea.sflag [#allocation3], 1
    %21 = vsyncpa %s20, 0
    %22 = vsyncpa [#allocation5], 0
    %s23 = scalar_lea.sflag [#allocation5], 1
    %24 = vsyncpa %s23, 0
    loop: start=0, step=1, limit=4
    $region2: #{cross_graph_encoder_layer.1} parent=1 // loop_pre_header
      _
    $region3: #{cross_graph_encoder_layer.1} parent=1 // loop_header
      %s26 = sphi 0, %s30
      %p27 = scmp.ge.s32.totalorder %s26, 4
      %s36 = sphi 0, %s38
      %s39 = sphi 0, %s36
      %s40 = sphi 0, %s39
      %s56 = sphi 0, %s40
      %s62 = sphi 0, %s64
      %s65 = sphi 0, %s62
      %s66 = sphi 0, %s65
      %s82 = sphi 0, %s66
      %s88 = sphi 0, %s90
      %s91 = sphi 0, %s88
      %s92 = sphi 0, %s91
      %s108 = sphi 0, %s92
      %s114 = sphi 0, %s116
      %s117 = sphi 0, %s114
      %s118 = sphi 0, %s117
      %s134 = sphi 0, %s118
      %s138 = sphi 0, %s138
      %s140 = sphi 0, %s138
      %s141 = sphi 0, %s140
      %s155 = sphi 0, %s141
      %s159 = sphi 0, %s159
      %s161 = sphi 0, %s159
      %s162 = sphi 0, %s161
      %s176 = sphi 0, %s162
      %s180 = sphi 0, %s180
      %s182 = sphi 0, %s180
      %s183 = sphi 0, %s182
      %s197 = sphi 0, %s183
      %s201 = sphi 0, %s201
      %s203 = sphi 0, %s201
      %s204 = sphi 0, %s203
      %s218 = sphi 0, %s204
      %s222 = sphi 0, %s222
      %s224 = sphi 0, %s222
      %s225 = sphi 0, %s224
      %s239 = sphi 0, %s225
      %s243 = sphi 0, %s243
      %s245 = sphi 0, %s243
      %s246 = sphi 0, %s245
      %s260 = sphi 0, %s246
      %s264 = sphi 0, %s264
      %s266 = sphi 0, %s264
      %s267 = sphi 0, %s266
      %s281 = sphi 0, %s267
      %s287 = sphi 0, %s289
      %s290 = sphi 0, %s287
      %s291 = sphi 0, %s290
      %s307 = sphi 0, %s291
      %s313 = sphi 0, %s315
      %s316 = sphi 0, %s313
      %s317 = sphi 0, %s316
      %s333 = sphi 0, %s317
      %s339 = sphi 0, %s341
      %s342 = sphi 0, %s339
      %s343 = sphi 0, %s342
      %s359 = sphi 0, %s343
    $region4: #{cross_graph_encoder_layer.1} parent=1 // loop_header_branch
      %29 = sbr.rel (%p27) target = $region8
    $region5: #{cross_graph_encoder_layer.1} parent=1 // loop_body
      %s31 = ssub.s32 %s26, 1
      %s32 = ssub.s32 %s26, 2
      %s33 = sadd.s32 %s26, 1
      %s34 = ssub.s32 %s26, %s33
      %p35 = scmp.eq.s32.totalorder %s34, 0
      %s37 = sadd.s32 %s36, 1
      %s38 = scalar_select %p35, %s36, %s37
      %p41 = pneg %p35
      %p42 = scmp.eq.s32.totalorder %s26, 1
      %p43 = por %p41, %p42
      %p44 = scmp.ne.s32.totalorder %s36, %s39
      %p45 = scmp.eq.s32.totalorder %s26, 0
      %p46 = por %p44, %p45
      %p47 = scmp.ne.s32.totalorder %s36, %s39
      %p48 = scmp.eq.s32.totalorder %s31, 1
      %p49 = por %p47, %p48
      %p50 = scmp.ne.s32.totalorder %s39, %s40
      %p51 = scmp.eq.s32.totalorder %s31, 0
      %p52 = por %p50, %p51
      %p53 = scmp.ne.s32.totalorder %s39, %s40
      %p54 = scmp.eq.s32.totalorder %s32, 1
      %p55 = por %p53, %p54
      %p57 = scmp.ne.s32.totalorder %s40, %s56
      %p58 = scmp.eq.s32.totalorder %s32, 0
      %p59 = por %p57, %p58
      %s60 = ssub.s32 %s26, %s33
      %p61 = scmp.eq.s32.totalorder %s60, 0
      %s63 = sadd.s32 %s62, 1
      %s64 = scalar_select %p61, %s62, %s63
      %p67 = pneg %p61
      %p68 = scmp.eq.s32.totalorder %s26, 1
      %p69 = por %p67, %p68
      %p70 = scmp.ne.s32.totalorder %s62, %s65
      %p71 = scmp.eq.s32.totalorder %s26, 0
      %p72 = por %p70, %p71
      %p73 = scmp.ne.s32.totalorder %s62, %s65
      %p74 = scmp.eq.s32.totalorder %s31, 1
      %p75 = por %p73, %p74
      %p76 = scmp.ne.s32.totalorder %s65, %s66
      %p77 = scmp.eq.s32.totalorder %s31, 0
      %p78 = por %p76, %p77
      %p79 = scmp.ne.s32.totalorder %s65, %s66
      %p80 = scmp.eq.s32.totalorder %s32, 1
      %p81 = por %p79, %p80
      %p83 = scmp.ne.s32.totalorder %s66, %s82
      %p84 = scmp.eq.s32.totalorder %s32, 0
      %p85 = por %p83, %p84
      %s86 = ssub.s32 %s26, %s33
      %p87 = scmp.eq.s32.totalorder %s86, 0
      %s89 = sadd.s32 %s88, 1
      %s90 = scalar_select %p87, %s88, %s89
      %p93 = pneg %p87
      %p94 = scmp.eq.s32.totalorder %s26, 1
      %p95 = por %p93, %p94
      %p96 = scmp.ne.s32.totalorder %s88, %s91
      %p97 = scmp.eq.s32.totalorder %s26, 0
      %p98 = por %p96, %p97
      %p99 = scmp.ne.s32.totalorder %s88, %s91
      %p100 = scmp.eq.s32.totalorder %s31, 1
      %p101 = por %p99, %p100
      %p102 = scmp.ne.s32.totalorder %s91, %s92
      %p103 = scmp.eq.s32.totalorder %s31, 0
      %p104 = por %p102, %p103
      %p105 = scmp.ne.s32.totalorder %s91, %s92
      %p106 = scmp.eq.s32.totalorder %s32, 1
      %p107 = por %p105, %p106
      %p109 = scmp.ne.s32.totalorder %s92, %s108
      %p110 = scmp.eq.s32.totalorder %s32, 0
      %p111 = por %p109, %p110
      %s112 = ssub.s32 %s26, %s33
      %p113 = scmp.eq.s32.totalorder %s112, 0
      %s115 = sadd.s32 %s114, 1
      %s116 = scalar_select %p113, %s114, %s115
      %p119 = pneg %p113
      %p120 = scmp.eq.s32.totalorder %s26, 1
      %p121 = por %p119, %p120
      %p122 = scmp.ne.s32.totalorder %s114, %s117
      %p123 = scmp.eq.s32.totalorder %s26, 0
      %p124 = por %p122, %p123
      %p125 = scmp.ne.s32.totalorder %s114, %s117
      %p126 = scmp.eq.s32.totalorder %s31, 1
      %p127 = por %p125, %p126
      %p128 = scmp.ne.s32.totalorder %s117, %s118
      %p129 = scmp.eq.s32.totalorder %s31, 0
      %p130 = por %p128, %p129
      %p131 = scmp.ne.s32.totalorder %s117, %s118
      %p132 = scmp.eq.s32.totalorder %s32, 1
      %p133 = por %p131, %p132
      %p135 = scmp.ne.s32.totalorder %s118, %s134
      %p136 = scmp.eq.s32.totalorder %s32, 0
      %p137 = por %p135, %p136
      %s139 = sadd.s32 %s138, 1
      %p142 = scmp.eq.s32.totalorder %s26, 1
      %p143 = scmp.ne.s32.totalorder %s138, %s140
      %p144 = scmp.eq.s32.totalorder %s26, 0
      %p145 = por %p143, %p144
      %p146 = scmp.ne.s32.totalorder %s138, %s140
      %p147 = scmp.eq.s32.totalorder %s31, 1
      %p148 = por %p146, %p147
      %p149 = scmp.ne.s32.totalorder %s140, %s141
      %p150 = scmp.eq.s32.totalorder %s31, 0
      %p151 = por %p149, %p150
      %p152 = scmp.ne.s32.totalorder %s140, %s141
      %p153 = scmp.eq.s32.totalorder %s32, 1
      %p154 = por %p152, %p153
      %p156 = scmp.ne.s32.totalorder %s141, %s155
      %p157 = scmp.eq.s32.totalorder %s32, 0
      %p158 = por %p156, %p157
      %s160 = sadd.s32 %s159, 1
      %p163 = scmp.eq.s32.totalorder %s26, 1
      %p164 = scmp.ne.s32.totalorder %s159, %s161
      %p165 = scmp.eq.s32.totalorder %s26, 0
      %p166 = por %p164, %p165
      %p167 = scmp.ne.s32.totalorder %s159, %s161
      %p168 = scmp.eq.s32.totalorder %s31, 1
      %p169 = por %p167, %p168
      %p170 = scmp.ne.s32.totalorder %s161, %s162
      %p171 = scmp.eq.s32.totalorder %s31, 0
      %p172 = por %p170, %p171
      %p173 = scmp.ne.s32.totalorder %s161, %s162
      %p174 = scmp.eq.s32.totalorder %s32, 1
      %p175 = por %p173, %p174
      %p177 = scmp.ne.s32.totalorder %s162, %s176
      %p178 = scmp.eq.s32.totalorder %s32, 0
      %p179 = por %p177, %p178
      %s181 = sadd.s32 %s180, 1
      %p184 = scmp.eq.s32.totalorder %s26, 1
      %p185 = scmp.ne.s32.totalorder %s180, %s182
      %p186 = scmp.eq.s32.totalorder %s26, 0
      %p187 = por %p185, %p186
      %p188 = scmp.ne.s32.totalorder %s180, %s182
      %p189 = scmp.eq.s32.totalorder %s31, 1
      %p190 = por %p188, %p189
      %p191 = scmp.ne.s32.totalorder %s182, %s183
      %p192 = scmp.eq.s32.totalorder %s31, 0
      %p193 = por %p191, %p192
      %p194 = scmp.ne.s32.totalorder %s182, %s183
      %p195 = scmp.eq.s32.totalorder %s32, 1
      %p196 = por %p194, %p195
      %p198 = scmp.ne.s32.totalorder %s183, %s197
      %p199 = scmp.eq.s32.totalorder %s32, 0
      %p200 = por %p198, %p199
      %s202 = sadd.s32 %s201, 1
      %p205 = scmp.eq.s32.totalorder %s26, 1
      %p206 = scmp.ne.s32.totalorder %s201, %s203
      %p207 = scmp.eq.s32.totalorder %s26, 0
      %p208 = por %p206, %p207
      %p209 = scmp.ne.s32.totalorder %s201, %s203
      %p210 = scmp.eq.s32.totalorder %s31, 1
      %p211 = por %p209, %p210
      %p212 = scmp.ne.s32.totalorder %s203, %s204
      %p213 = scmp.eq.s32.totalorder %s31, 0
      %p214 = por %p212, %p213
      %p215 = scmp.ne.s32.totalorder %s203, %s204
      %p216 = scmp.eq.s32.totalorder %s32, 1
      %p217 = por %p215, %p216
      %p219 = scmp.ne.s32.totalorder %s204, %s218
      %p220 = scmp.eq.s32.totalorder %s32, 0
      %p221 = por %p219, %p220
      %s223 = sadd.s32 %s222, 1
      %p226 = scmp.eq.s32.totalorder %s26, 1
      %p227 = scmp.ne.s32.totalorder %s222, %s224
      %p228 = scmp.eq.s32.totalorder %s26, 0
      %p229 = por %p227, %p228
      %p230 = scmp.ne.s32.totalorder %s222, %s224
      %p231 = scmp.eq.s32.totalorder %s31, 1
      %p232 = por %p230, %p231
      %p233 = scmp.ne.s32.totalorder %s224, %s225
      %p234 = scmp.eq.s32.totalorder %s31, 0
      %p235 = por %p233, %p234
      %p236 = scmp.ne.s32.totalorder %s224, %s225
      %p237 = scmp.eq.s32.totalorder %s32, 1
      %p238 = por %p236, %p237
      %p240 = scmp.ne.s32.totalorder %s225, %s239
      %p241 = scmp.eq.s32.totalorder %s32, 0
      %p242 = por %p240, %p241
      %s244 = sadd.s32 %s243, 1
      %p247 = scmp.eq.s32.totalorder %s26, 1
      %p248 = scmp.ne.s32.totalorder %s243, %s245
      %p249 = scmp.eq.s32.totalorder %s26, 0
      %p250 = por %p248, %p249
      %p251 = scmp.ne.s32.totalorder %s243, %s245
      %p252 = scmp.eq.s32.totalorder %s31, 1
      %p253 = por %p251, %p252
      %p254 = scmp.ne.s32.totalorder %s245, %s246
      %p255 = scmp.eq.s32.totalorder %s31, 0
      %p256 = por %p254, %p255
      %p257 = scmp.ne.s32.totalorder %s245, %s246
      %p258 = scmp.eq.s32.totalorder %s32, 1
      %p259 = por %p257, %p258
      %p261 = scmp.ne.s32.totalorder %s246, %s260
      %p262 = scmp.eq.s32.totalorder %s32, 0
      %p263 = por %p261, %p262
      %s265 = sadd.s32 %s264, 1
      %p268 = scmp.eq.s32.totalorder %s26, 1
      %p269 = scmp.ne.s32.totalorder %s264, %s266
      %p270 = scmp.eq.s32.totalorder %s26, 0
      %p271 = por %p269, %p270
      %p272 = scmp.ne.s32.totalorder %s264, %s266
      %p273 = scmp.eq.s32.totalorder %s31, 1
      %p274 = por %p272, %p273
      %p275 = scmp.ne.s32.totalorder %s266, %s267
      %p276 = scmp.eq.s32.totalorder %s31, 0
      %p277 = por %p275, %p276
      %p278 = scmp.ne.s32.totalorder %s266, %s267
      %p279 = scmp.eq.s32.totalorder %s32, 1
      %p280 = por %p278, %p279
      %p282 = scmp.ne.s32.totalorder %s267, %s281
      %p283 = scmp.eq.s32.totalorder %s32, 0
      %p284 = por %p282, %p283
      %s285 = ssub.s32 %s26, %s33
      %p286 = scmp.eq.s32.totalorder %s285, 0
      %s288 = sadd.s32 %s287, 1
      %s289 = scalar_select %p286, %s287, %s288
      %p292 = pneg %p286
      %p293 = scmp.eq.s32.totalorder %s26, 1
      %p294 = por %p292, %p293
      %p295 = scmp.ne.s32.totalorder %s287, %s290
      %p296 = scmp.eq.s32.totalorder %s26, 0
      %p297 = por %p295, %p296
      %p298 = scmp.ne.s32.totalorder %s287, %s290
      %p299 = scmp.eq.s32.totalorder %s31, 1
      %p300 = por %p298, %p299
      %p301 = scmp.ne.s32.totalorder %s290, %s291
      %p302 = scmp.eq.s32.totalorder %s31, 0
      %p303 = por %p301, %p302
      %p304 = scmp.ne.s32.totalorder %s290, %s291
      %p305 = scmp.eq.s32.totalorder %s32, 1
      %p306 = por %p304, %p305
      %p308 = scmp.ne.s32.totalorder %s291, %s307
      %p309 = scmp.eq.s32.totalorder %s32, 0
      %p310 = por %p308, %p309
      %s311 = ssub.s32 %s26, %s33
      %p312 = scmp.eq.s32.totalorder %s311, 0
      %s314 = sadd.s32 %s313, 1
      %s315 = scalar_select %p312, %s313, %s314
      %p318 = pneg %p312
      %p319 = scmp.eq.s32.totalorder %s26, 1
      %p320 = por %p318, %p319
      %p321 = scmp.ne.s32.totalorder %s313, %s316
      %p322 = scmp.eq.s32.totalorder %s26, 0
      %p323 = por %p321, %p322
      %p324 = scmp.ne.s32.totalorder %s313, %s316
      %p325 = scmp.eq.s32.totalorder %s31, 1
      %p326 = por %p324, %p325
      %p327 = scmp.ne.s32.totalorder %s316, %s317
      %p328 = scmp.eq.s32.totalorder %s31, 0
      %p329 = por %p327, %p328
      %p330 = scmp.ne.s32.totalorder %s316, %s317
      %p331 = scmp.eq.s32.totalorder %s32, 1
      %p332 = por %p330, %p331
      %p334 = scmp.ne.s32.totalorder %s317, %s333
      %p335 = scmp.eq.s32.totalorder %s32, 0
      %p336 = por %p334, %p335
      %s337 = ssub.s32 %s26, %s33
      %p338 = scmp.eq.s32.totalorder %s337, 0
      %s340 = sadd.s32 %s339, 1
      %s341 = scalar_select %p338, %s339, %s340
      %p344 = pneg %p338
      %p345 = scmp.eq.s32.totalorder %s26, 1
      %p346 = por %p344, %p345
      %p347 = scmp.ne.s32.totalorder %s339, %s342
      %p348 = scmp.eq.s32.totalorder %s26, 0
      %p349 = por %p347, %p348
      %p350 = scmp.ne.s32.totalorder %s339, %s342
      %p351 = scmp.eq.s32.totalorder %s31, 1
      %p352 = por %p350, %p351
      %p353 = scmp.ne.s32.totalorder %s342, %s343
      %p354 = scmp.eq.s32.totalorder %s31, 0
      %p355 = por %p353, %p354
      %p356 = scmp.ne.s32.totalorder %s342, %s343
      %p357 = scmp.eq.s32.totalorder %s32, 1
      %p358 = por %p356, %p357
      %p360 = scmp.ne.s32.totalorder %s343, %s359
      %p361 = scmp.eq.s32.totalorder %s32, 0
      %p362 = por %p360, %p361
      %p363 = scmp.le.s32.totalorder 1, %s26
      %p364 = scmp.lt.s32.totalorder %s26, 3
      %p365 = pnand %p363, %p364
      %p366 = pneg %p365
      // Predicated region
      $region9: #{cross_graph_encoder_layer.1} parent=5 // pred_check
        _
      $region10: #{cross_graph_encoder_layer.1} parent=5 // pred_check_branch
        %368 = sbr.rel (%p365) target = $region12
      $region11: #{cross_graph_encoder_layer.1} parent=5 // pred_region
        %s369 = ssub.s32 %s26, 1
        // Predicated region
        $region13: #{cross_graph_encoder_layer.1} parent=11 // pred_check
          %p370 = pneg %p151
        $region14: #{cross_graph_encoder_layer.1} parent=11 // pred_check_branch
          %372 = sbr.rel (%p370) target = $region16
        $region15: #{cross_graph_encoder_layer.1} parent=11 // pred_region
          _
        $region16: #{cross_graph_encoder_layer.1} parent=11 // pred_fallthru
          _
        // Predicated region
        $region17: #{cross_graph_encoder_layer.1} parent=11 // pred_check
          %p373 = pneg %p172
        $region18: #{cross_graph_encoder_layer.1} parent=11 // pred_check_branch
          %375 = sbr.rel (%p373) target = $region20
        $region19: #{cross_graph_encoder_layer.1} parent=11 // pred_region
          _
        $region20: #{cross_graph_encoder_layer.1} parent=11 // pred_fallthru
          _
        // Predicated region
        $region21: #{cross_graph_encoder_layer.1} parent=11 // pred_check
          %p376 = pneg %p193
        $region22: #{cross_graph_encoder_layer.1} parent=11 // pred_check_branch
          %378 = sbr.rel (%p376) target = $region24
        $region23: #{cross_graph_encoder_layer.1} parent=11 // pred_region
          _
        $region24: #{cross_graph_encoder_layer.1} parent=11 // pred_fallthru
          _
        // Predicated region
        $region25: #{cross_graph_encoder_layer.1} parent=11 // pred_check
          %p379 = pneg %p214
        $region26: #{cross_graph_encoder_layer.1} parent=11 // pred_check_branch
          %381 = sbr.rel (%p379) target = $region28
        $region27: #{cross_graph_encoder_layer.1} parent=11 // pred_region
          _
        $region28: #{cross_graph_encoder_layer.1} parent=11 // pred_fallthru
          _
        // Predicated region
        $region29: #{cross_graph_encoder_layer.1} parent=11 // pred_check
          %p382 = pneg %p235
        $region30: #{cross_graph_encoder_layer.1} parent=11 // pred_check_branch
          %384 = sbr.rel (%p382) target = $region32
        $region31: #{cross_graph_encoder_layer.1} parent=11 // pred_region
          _
        $region32: #{cross_graph_encoder_layer.1} parent=11 // pred_fallthru
          _
        // Predicated region
        $region33: #{cross_graph_encoder_layer.1} parent=11 // pred_check
          %p385 = pneg %p256
        $region34: #{cross_graph_encoder_layer.1} parent=11 // pred_check_branch
          %387 = sbr.rel (%p385) target = $region36
        $region35: #{cross_graph_encoder_layer.1} parent=11 // pred_region
          _
        $region36: #{cross_graph_encoder_layer.1} parent=11 // pred_fallthru
          _
        // Predicated region
        $region37: #{cross_graph_encoder_layer.1} parent=11 // pred_check
          %p388 = pneg %p277
        $region38: #{cross_graph_encoder_layer.1} parent=11 // pred_check_branch
          %390 = sbr.rel (%p388) target = $region40
        $region39: #{cross_graph_encoder_layer.1} parent=11 // pred_region
          _
        $region40: #{cross_graph_encoder_layer.1} parent=11 // pred_fallthru
          _
      $region12: #{cross_graph_encoder_layer.1} parent=5 // pred_fallthru
        _
      %p391 = scmp.lt.s32.totalorder %s26, 2
      // Predicated region
      $region41: #{cross_graph_encoder_layer.1} parent=5 // pred_check
        %p392 = pneg %p391
      $region42: #{cross_graph_encoder_layer.1} parent=5 // pred_check_branch
        %394 = sbr.rel (%p392) target = $region44
      $region43: #{cross_graph_encoder_layer.1} parent=5 // pred_region
        // Predicated region
        $region45: #{cross_graph_encoder_layer.1} parent=43 // pred_check
          %p395 = pneg %p46
        $region46: #{cross_graph_encoder_layer.1} parent=43 // pred_check_branch
          %397 = sbr.rel (%p395) target = $region48
        $region47: #{cross_graph_encoder_layer.1} parent=43 // pred_region
          %p398 = scmp.lt.s32.totalorder %s26, 1
          %s399 = scalar_select %p398, %s26, 1
          %s400 = smul.addr %s399, 8
          %s401 = scalar_lea.vmem %s0, %s400
        $region48: #{cross_graph_encoder_layer.1} parent=43 // pred_fallthru
          _
        // Predicated region
        $region49: #{cross_graph_encoder_layer.1} parent=43 // pred_check
          %p402 = pneg %p72
        $region50: #{cross_graph_encoder_layer.1} parent=43 // pred_check_branch
          %404 = sbr.rel (%p402) target = $region52
        $region51: #{cross_graph_encoder_layer.1} parent=43 // pred_region
          %p405 = scmp.lt.s32.totalorder %s26, 1
          %s406 = scalar_select %p405, %s26, 1
          %s407 = smul.addr %s406, 8
          %s408 = scalar_lea.vmem %s1, %s407
        $region52: #{cross_graph_encoder_layer.1} parent=43 // pred_fallthru
          _
        // Predicated region
        $region53: #{cross_graph_encoder_layer.1} parent=43 // pred_check
          %p409 = pneg %p98
        $region54: #{cross_graph_encoder_layer.1} parent=43 // pred_check_branch
          %411 = sbr.rel (%p409) target = $region56
        $region55: #{cross_graph_encoder_layer.1} parent=43 // pred_region
          %p412 = scmp.lt.s32.totalorder %s26, 1
          %s413 = scalar_select %p412, %s26, 1
          %s414 = smul.addr %s413, 8
          %s415 = scalar_lea.vmem %s2, %s414
        $region56: #{cross_graph_encoder_layer.1} parent=43 // pred_fallthru
          _
        // Predicated region
        $region57: #{cross_graph_encoder_layer.1} parent=43 // pred_check
          %p416 = pneg %p124
        $region58: #{cross_graph_encoder_layer.1} parent=43 // pred_check_branch
          %418 = sbr.rel (%p416) target = $region60
        $region59: #{cross_graph_encoder_layer.1} parent=43 // pred_region
          %p419 = scmp.lt.s32.totalorder %s26, 1
          %s420 = scalar_select %p419, %s26, 1
          %s421 = smul.addr %s420, 8
          %s422 = scalar_lea.vmem %s3, %s421
        $region60: #{cross_graph_encoder_layer.1} parent=43 // pred_fallthru
          _
      $region44: #{cross_graph_encoder_layer.1} parent=5 // pred_fallthru
        _
      %p423 = scmp.le.s32.totalorder 1, %s26
      %p424 = scmp.lt.s32.totalorder %s26, 3
      %p425 = pnand %p423, %p424
      %p426 = pneg %p425
      // Predicated region
      $region61: #{cross_graph_encoder_layer.1} parent=5 // pred_check
        _
      $region62: #{cross_graph_encoder_layer.1} parent=5 // pred_check_branch
        %428 = sbr.rel (%p425) target = $region64
      $region63: #{cross_graph_encoder_layer.1} parent=5 // pred_region
        %s429 = ssub.s32 %s26, 1
        %p430 = scmp.lt.s32.totalorder %s31, 1
        %s431 = scalar_select %p430, %s31, 1
        %s432 = smul.addr %s431, 8
        %s433 = scalar_lea.vmem %s0, %s432
        %p434 = pneg %p52
        %p435 = pneg %p49
        %p436 = scmp.lt.s32.totalorder %s31, 1
        %s437 = scalar_select %p436, %s31, 1
        %s438 = smul.addr %s437, 8
        %s439 = scalar_lea.vmem %s1, %s438
        %p440 = pneg %p78
        %p441 = pneg %p75
        %p442 = scmp.lt.s32.totalorder %s31, 1
        %s443 = scalar_select %p442, %s31, 1
        %s444 = smul.addr %s443, 8
        %s445 = scalar_lea.vmem %s2, %s444
        %p446 = pneg %p104
        %p447 = pneg %p101
        %p448 = scmp.lt.s32.totalorder %s31, 1
        %s449 = scalar_select %p448, %s31, 1
        %s450 = smul.addr %s449, 8
        %s451 = scalar_lea.vmem %s3, %s450
        %p452 = pneg %p130
        %p453 = pneg %p127
        %p454 = pneg %p151
        %p455 = pneg %p148
        %p456 = pneg %p172
        %p457 = pneg %p169
        %p458 = pneg %p193
        %p459 = pneg %p190
        %p460 = pneg %p214
        %p461 = pneg %p211
        %p462 = pneg %p235
        %p463 = pneg %p232
        %p464 = pneg %p256
        %p465 = pneg %p253
        %p466 = pneg %p277
        %p467 = pneg %p274
        %p468 = pneg %p303
        %p469 = pneg %p300
        %s470 = sand.u32 %s290, 1
        %s471 = scalar_lea.sflag [#allocation3], %s470
        %s472 = sand.u32 %s290, 1
        %s473 = smul.addr %s472, 8
        %s474 = scalar_lea.vmem [#allocation2], %s473
        %p475 = pneg %p329
        %p476 = pneg %p326
        %s477 = sand.u32 %s31, 1
        %s478 = scalar_lea.sflag [#allocation5], %s477
        %s479 = sand.u32 %s316, 1
        %s480 = smul.addr %s479, 8
        %s481 = scalar_lea.vmem [#allocation4], %s480
        %p482 = pneg %p355
        %p483 = pneg %p352
        %s484 = sand.u32 %s31, 1
        %s485 = scalar_lea.sflag [#allocation5], %s484
        %s486 = sand.u32 %s342, 1
        %s487 = smul.addr %s486, 16
        %s488 = scalar_lea.vmem [#allocation6], %s487
        %p489 = scmp.lt.s32.totalorder %s31, 1
        %s490 = scalar_select %p489, %s31, 1
        %s491 = smul.addr %s490, 8
        %s492 = scalar_lea.vmem %s0, %s491
        %p493 = scmp.lt.s32.totalorder %s31, 1
        %s494 = scalar_select %p493, %s31, 1
        %s495 = smul.addr %s494, 8
        %s496 = scalar_lea.vmem %s1, %s495
        %p497 = scmp.lt.s32.totalorder %s31, 1
        %s498 = scalar_select %p497, %s31, 1
        %s499 = smul.addr %s498, 8
        %s500 = scalar_lea.vmem %s2, %s499
        %p501 = scmp.lt.s32.totalorder %s31, 1
        %s502 = scalar_select %p501, %s31, 1
        %s503 = smul.addr %s502, 8
        %s504 = scalar_lea.vmem %s3, %s503
        %v505 = vld [vmem:[%s492] sm:$0xff]
        %v506 = vld [vmem:[%s496] sm:$0xff]
        %v507 = vld [vmem:[%s500] sm:$0xff]
        %v508 = vld [vmem:[%s504] sm:$0xff]
        %v509 = vld [vmem:[%s4] sm:$0xff]
        %v510 = vld [vmem:[%s4 + $0x8] sm:$0xff]
        %v511 = vld [vmem:[%s4 + $0x10] sm:$0xff]
        %v512 = vld [vmem:[%s4 + $0x18] sm:$0xff]
        %v513 = vld [vmem:[%s5] sm:$0x1]
        %v515 = vlaneseq
        %v516 = vshrl.u32 %v515, 7
        %v517 = vsub.s32 0, %v516
        %v518 = vrot.slane %v513, %v517
        %vm520 = vcmask 261120
        %v522 = vsel %vm520, %v505, 0
        %524 = vmatprep.subr.mxu0 0.0
        %525 = vmatpush1.msra.mxu0 %v509
        %526 = vmatprep.subr.mxu0 0.0
        %527 = vmatpush1.msra.mxu0 %v510
        %528 = vmatprep.subr.mxu0 0.0
        %529 = vmatpush1.msra.mxu0 %v511
        %530 = vmatprep.subr.mxu0 0.0
        %531 = vmatpush1.msra.mxu0 %v512
        %532 = vmatprep.subr.mxu0 0.0
        %533 = vmatpush1.msra.mxu0 0.0
        %534 = vmatprep.subr.mxu0 0.0
        %535 = vmatpush1.msra.mxu0 0.0
        %536 = vmatprep.subr.mxu0 0.0
        %537 = vmatpush1.msra.mxu0 0.0
        %538 = vmatprep.subr.mxu0 0.0
        %539 = vmatpush1.msra.mxu0 0.0
        %540 = vmatprep.subr.mxu0 0.0
        %541 = vmatpush1.msra.mxu0 0.0
        %542 = vmatprep.subr.mxu0 0.0
        %543 = vmatpush1.msra.mxu0 0.0
        %544 = vmatprep.subr.mxu0 0.0
        %545 = vmatpush1.msra.mxu0 0.0
        %546 = vmatprep.subr.mxu0 0.0
        %547 = vmatpush1.msra.mxu0 0.0
        %548 = vmatprep.subr.mxu0 0.0
        %549 = vmatpush1.msra.mxu0 0.0
        %550 = vmatprep.subr.mxu0 0.0
        %551 = vmatpush1.msra.mxu0 0.0
        %552 = vmatprep.subr.mxu0 0.0
        %553 = vmatpush1.msra.mxu0 0.0
        %554 = vmatprep.subr.mxu0 0.0
        %555 = vmatpush1.msra.mxu0 0.0
        %556 = vmatprep.subr.mxu0 0.0
        %557 = vmatpush1.msra.mxu0 0.0
        %558 = vmatprep.subr.mxu0 0.0
        %559 = vmatpush1.msra.mxu0 0.0
        %560 = vmatprep.subr.mxu0 0.0
        %561 = vmatpush1.msra.mxu0 0.0
        %562 = vmatprep.subr.mxu0 0.0
        %563 = vmatpush1.msra.mxu0 0.0
        %564 = vmatprep.subr.mxu0 0.0
        %565 = vmatpush1.msra.mxu0 0.0
        %566 = vmatprep.subr.mxu0 0.0
        %567 = vmatpush1.msra.mxu0 0.0
        %568 = vmatprep.subr.mxu0 0.0
        %569 = vmatpush1.msra.mxu0 0.0
        %570 = vmatprep.subr.mxu0 0.0
        %571 = vmatpush1.msra.mxu0 0.0
        %572 = vmatprep.subr.mxu0 0.0
        %573 = vmatpush1.msra.mxu0 0.0
        %574 = vmatprep.subr.mxu0 0.0
        %575 = vmatpush1.msra.mxu0 0.0
        %576 = vmatprep.subr.mxu0 0.0
        %577 = vmatpush1.msra.mxu0 0.0
        %578 = vmatprep.subr.mxu0 0.0
        %579 = vmatpush1.msra.mxu0 0.0
        %580 = vmatprep.subr.mxu0 0.0
        %581 = vmatpush1.msra.mxu0 0.0
        %582 = vmatprep.subr.mxu0 0.0
        %583 = vmatpush1.msra.mxu0 0.0
        %584 = vmatprep.subr.mxu0 0.0
        %585 = vmatpush1.msra.mxu0 0.0
        %586 = vmatprep.subr.mxu0 0.0
        %587 = vmatpush1.msra.mxu0 0.0
        %588 = vmatprep.mubr.f32.mxu0 0.0
        %589 = vmatmul.mubr.f32.gmra.mrb[0].mxu0 %v522
        %v590 = vpop.f32.mrb[0].mxu0
        %v591 = vadd.f32 %v518, %v590
        %v592 = vpop.f32.mrb[0].mxu0
        %593 = vdwg.mxu0
        %v595 = vsel %vm520, %v506, 0
        %597 = vmatprep.subr.mxu0 0.0
        %598 = vmatpush1.msra.mxu0 %v509
        %599 = vmatprep.subr.mxu0 0.0
        %600 = vmatpush1.msra.mxu0 %v510
        %601 = vmatprep.subr.mxu0 0.0
        %602 = vmatpush1.msra.mxu0 %v511
        %603 = vmatprep.subr.mxu0 0.0
        %604 = vmatpush1.msra.mxu0 %v512
        %605 = vmatprep.subr.mxu0 0.0
        %606 = vmatpush1.msra.mxu0 0.0
        %607 = vmatprep.subr.mxu0 0.0
        %608 = vmatpush1.msra.mxu0 0.0
        %609 = vmatprep.subr.mxu0 0.0
        %610 = vmatpush1.msra.mxu0 0.0
        %611 = vmatprep.subr.mxu0 0.0
        %612 = vmatpush1.msra.mxu0 0.0
        %613 = vmatprep.subr.mxu0 0.0
        %614 = vmatpush1.msra.mxu0 0.0
        %615 = vmatprep.subr.mxu0 0.0
        %616 = vmatpush1.msra.mxu0 0.0
        %617 = vmatprep.subr.mxu0 0.0
        %618 = vmatpush1.msra.mxu0 0.0
        %619 = vmatprep.subr.mxu0 0.0
        %620 = vmatpush1.msra.mxu0 0.0
        %621 = vmatprep.subr.mxu0 0.0
        %622 = vmatpush1.msra.mxu0 0.0
        %623 = vmatprep.subr.mxu0 0.0
        %624 = vmatpush1.msra.mxu0 0.0
        %625 = vmatprep.subr.mxu0 0.0
        %626 = vmatpush1.msra.mxu0 0.0
        %627 = vmatprep.subr.mxu0 0.0
        %628 = vmatpush1.msra.mxu0 0.0
        %629 = vmatprep.subr.mxu0 0.0
        %630 = vmatpush1.msra.mxu0 0.0
        %631 = vmatprep.subr.mxu0 0.0
        %632 = vmatpush1.msra.mxu0 0.0
        %633 = vmatprep.subr.mxu0 0.0
        %634 = vmatpush1.msra.mxu0 0.0
        %635 = vmatprep.subr.mxu0 0.0
        %636 = vmatpush1.msra.mxu0 0.0
        %637 = vmatprep.subr.mxu0 0.0
        %638 = vmatpush1.msra.mxu0 0.0
        %639 = vmatprep.subr.mxu0 0.0
        %640 = vmatpush1.msra.mxu0 0.0
        %641 = vmatprep.subr.mxu0 0.0
        %642 = vmatpush1.msra.mxu0 0.0
        %643 = vmatprep.subr.mxu0 0.0
        %644 = vmatpush1.msra.mxu0 0.0
        %645 = vmatprep.subr.mxu0 0.0
        %646 = vmatpush1.msra.mxu0 0.0
        %647 = vmatprep.subr.mxu0 0.0
        %648 = vmatpush1.msra.mxu0 0.0
        %649 = vmatprep.subr.mxu0 0.0
        %650 = vmatpush1.msra.mxu0 0.0
        %651 = vmatprep.subr.mxu0 0.0
        %652 = vmatpush1.msra.mxu0 0.0
        %653 = vmatprep.subr.mxu0 0.0
        %654 = vmatpush1.msra.mxu0 0.0
        %655 = vmatprep.subr.mxu0 0.0
        %656 = vmatpush1.msra.mxu0 0.0
        %657 = vmatprep.subr.mxu0 0.0
        %658 = vmatpush1.msra.mxu0 0.0
        %659 = vmatprep.subr.mxu0 0.0
        %660 = vmatpush1.msra.mxu0 0.0
        %661 = vmatprep.mubr.f32.mxu0 0.0
        %662 = vmatmul.mubr.f32.gmra.mrb[0].mxu0 %v595
        %v663 = vpop.f32.mrb[0].mxu0
        %v664 = vadd.f32 %v518, %v663
        %v665 = vpop.f32.mrb[0].mxu0
        %666 = vdwg.mxu0
        %v667 = vmul.f32 %v591, 0.25
        %v668 = vmul.f32 %v664, 0.25
        %670 = vrot.lane.b32.xlu0 %v664, 96
        %v671 = vpop.permute.xlu0 %670
        %vm672 = vcmask 130048
        %v674 = vsel %vm672, %v667, 0
        %v676 = vsel %vm672, %v671, 0
        %678 = vmatprep.subr.mxu0 0.0
        %679 = vmatpush1.xpose.msra.mxu0 %v676
        %680 = vmatprep.subr.mxu0 0.0
        %681 = vmatpush1.xpose.msra.mxu0 0.0
        %682 = vmatprep.subr.mxu0 0.0
        %683 = vmatpush1.xpose.msra.mxu0 0.0
        %684 = vmatprep.subr.mxu0 0.0
        %685 = vmatpush1.xpose.msra.mxu0 0.0
        %686 = vmatprep.subr.mxu0 0.0
        %687 = vmatpush1.xpose.msra.mxu0 0.0
        %688 = vmatprep.subr.mxu0 0.0
        %689 = vmatpush1.xpose.msra.mxu0 0.0
        %690 = vmatprep.subr.mxu0 0.0
        %691 = vmatpush1.xpose.msra.mxu0 0.0
        %692 = vmatprep.subr.mxu0 0.0
        %693 = vmatpush1.xpose.msra.mxu0 0.0
        %694 = vmatprep.subr.mxu0 0.0
        %695 = vmatpush1.xpose.msra.mxu0 0.0
        %696 = vmatprep.subr.mxu0 0.0
        %697 = vmatpush1.xpose.msra.mxu0 0.0
        %698 = vmatprep.subr.mxu0 0.0
        %699 = vmatpush1.xpose.msra.mxu0 0.0
        %700 = vmatprep.subr.mxu0 0.0
        %701 = vmatpush1.xpose.msra.mxu0 0.0
        %702 = vmatprep.subr.mxu0 0.0
        %703 = vmatpush1.xpose.msra.mxu0 0.0
        %704 = vmatprep.subr.mxu0 0.0
        %705 = vmatpush1.xpose.msra.mxu0 0.0
        %706 = vmatprep.subr.mxu0 0.0
        %707 = vmatpush1.xpose.msra.mxu0 0.0
        %708 = vmatprep.subr.mxu0 0.0
        %709 = vmatpush1.xpose.msra.mxu0 0.0
        %710 = vmatprep.subr.mxu0 0.0
        %711 = vmatpush1.xpose.msra.mxu0 0.0
        %712 = vmatprep.subr.mxu0 0.0
        %713 = vmatpush1.xpose.msra.mxu0 0.0
        %714 = vmatprep.subr.mxu0 0.0
        %715 = vmatpush1.xpose.msra.mxu0 0.0
        %716 = vmatprep.subr.mxu0 0.0
        %717 = vmatpush1.xpose.msra.mxu0 0.0
        %718 = vmatprep.subr.mxu0 0.0
        %719 = vmatpush1.xpose.msra.mxu0 0.0
        %720 = vmatprep.subr.mxu0 0.0
        %721 = vmatpush1.xpose.msra.mxu0 0.0
        %722 = vmatprep.subr.mxu0 0.0
        %723 = vmatpush1.xpose.msra.mxu0 0.0
        %724 = vmatprep.subr.mxu0 0.0
        %725 = vmatpush1.xpose.msra.mxu0 0.0
        %726 = vmatprep.subr.mxu0 0.0
        %727 = vmatpush1.xpose.msra.mxu0 0.0
        %728 = vmatprep.subr.mxu0 0.0
        %729 = vmatpush1.xpose.msra.mxu0 0.0
        %730 = vmatprep.subr.mxu0 0.0
        %731 = vmatpush1.xpose.msra.mxu0 0.0
        %732 = vmatprep.subr.mxu0 0.0
        %733 = vmatpush1.xpose.msra.mxu0 0.0
        %734 = vmatprep.subr.mxu0 0.0
        %735 = vmatpush1.xpose.msra.mxu0 0.0
        %736 = vmatprep.subr.mxu0 0.0
        %737 = vmatpush1.xpose.msra.mxu0 0.0
        %738 = vmatprep.subr.mxu0 0.0
        %739 = vmatpush1.xpose.msra.mxu0 0.0
        %740 = vmatprep.subr.mxu0 0.0
        %741 = vmatpush1.xpose.msra.mxu0 0.0
        %742 = vmatprep.mubr.f32.mxu0 0.0
        %743 = vmatmul.mubr.f32.gmra.mrb[0].mxu0 %v674
        %v744 = vpop.f32.mrb[0].mxu0
        %v745 = vadd.f32 0.0, %v744
        %v746 = vpop.f32.mrb[0].mxu0
        %747 = vdwg.mxu0
        %vm748 = vcmask 64512
        %v749 = vsel %vm748, %v745, -inf
        %750 = vmax.xlane.f32.xlu0 %v749
        %v751 = vpop.xlane.xlu0 %750
        %v752 = vsub.f32 %v745, %v751
        %v753 = vmul.f32 %v752, 1.442695
        %v754 = vpow.pop %v753
        %v755 = vsel %vm748, %v754, 0.0
        %756 = vadd.xlane.f32.xlu0 %v755
        %v757 = vpop.xlane.xlu0 %756
        %v758 = vrcp.pop %v757
        %v759 = vmul.f32 %v754, %v758
        %760 = vst.msk [vmem:[%s488] sm:$0xff] %vm748, %v759
        %761 = vrot.lane.b32.xlu0 %v664, 64
        %v762 = vpop.permute.xlu0 %761
        %v765 = vsel %vm748, %v759, 0
        %767 = vmatprep.subr.mxu0 0.0
        %768 = vmatpush1.msra.mxu0 %v762
        %769 = vmatprep.subr.mxu0 0.0
        %770 = vmatpush1.msra.mxu0 0.0
        %771 = vmatprep.subr.mxu0 0.0
        %772 = vmatpush1.msra.mxu0 0.0
        %773 = vmatprep.subr.mxu0 0.0
        %774 = vmatpush1.msra.mxu0 0.0
        %775 = vmatprep.subr.mxu0 0.0
        %776 = vmatpush1.msra.mxu0 0.0
        %777 = vmatprep.subr.mxu0 0.0
        %778 = vmatpush1.msra.mxu0 0.0
        %779 = vmatprep.subr.mxu0 0.0
        %780 = vmatpush1.msra.mxu0 0.0
        %781 = vmatprep.subr.mxu0 0.0
        %782 = vmatpush1.msra.mxu0 0.0
        %783 = vmatprep.subr.mxu0 0.0
        %784 = vmatpush1.msra.mxu0 0.0
        %785 = vmatprep.subr.mxu0 0.0
        %786 = vmatpush1.msra.mxu0 0.0
        %787 = vmatprep.subr.mxu0 0.0
        %788 = vmatpush1.msra.mxu0 0.0
        %789 = vmatprep.subr.mxu0 0.0
        %790 = vmatpush1.msra.mxu0 0.0
        %791 = vmatprep.subr.mxu0 0.0
        %792 = vmatpush1.msra.mxu0 0.0
        %793 = vmatprep.subr.mxu0 0.0
        %794 = vmatpush1.msra.mxu0 0.0
        %795 = vmatprep.subr.mxu0 0.0
        %796 = vmatpush1.msra.mxu0 0.0
        %797 = vmatprep.subr.mxu0 0.0
        %798 = vmatpush1.msra.mxu0 0.0
        %799 = vmatprep.subr.mxu0 0.0
        %800 = vmatpush1.msra.mxu0 0.0
        %801 = vmatprep.subr.mxu0 0.0
        %802 = vmatpush1.msra.mxu0 0.0
        %803 = vmatprep.subr.mxu0 0.0
        %804 = vmatpush1.msra.mxu0 0.0
        %805 = vmatprep.subr.mxu0 0.0
        %806 = vmatpush1.msra.mxu0 0.0
        %807 = vmatprep.subr.mxu0 0.0
        %808 = vmatpush1.msra.mxu0 0.0
        %809 = vmatprep.subr.mxu0 0.0
        %810 = vmatpush1.msra.mxu0 0.0
        %811 = vmatprep.subr.mxu0 0.0
        %812 = vmatpush1.msra.mxu0 0.0
        %813 = vmatprep.subr.mxu0 0.0
        %814 = vmatpush1.msra.mxu0 0.0
        %815 = vmatprep.subr.mxu0 0.0
        %816 = vmatpush1.msra.mxu0 0.0
        %817 = vmatprep.subr.mxu0 0.0
        %818 = vmatpush1.msra.mxu0 0.0
        %819 = vmatprep.subr.mxu0 0.0
        %820 = vmatpush1.msra.mxu0 0.0
        %821 = vmatprep.subr.mxu0 0.0
        %822 = vmatpush1.msra.mxu0 0.0
        %823 = vmatprep.subr.mxu0 0.0
        %824 = vmatpush1.msra.mxu0 0.0
        %825 = vmatprep.subr.mxu0 0.0
        %826 = vmatpush1.msra.mxu0 0.0
        %827 = vmatprep.subr.mxu0 0.0
        %828 = vmatpush1.msra.mxu0 0.0
        %829 = vmatprep.subr.mxu0 0.0
        %830 = vmatpush1.msra.mxu0 0.0
        %831 = vmatprep.mubr.f32.mxu0 0.0
        %832 = vmatmul.mubr.f32.gmra.mrb[0].mxu0 %v765
        %v833 = vpop.f32.mrb[0].mxu0
        %v834 = vadd.f32 0.0, %v833
        %v835 = vpop.f32.mrb[0].mxu0
        %836 = vdwg.mxu0
        %838 = vrot.lane.b32.xlu0 %v591, 96
        %v839 = vpop.permute.xlu0 %838
        %v841 = vsel %vm672, %v668, 0
        %v843 = vsel %vm672, %v839, 0
        %845 = vmatprep.subr.mxu0 0.0
        %846 = vmatpush1.xpose.msra.mxu0 %v843
        %847 = vmatprep.subr.mxu0 0.0
        %848 = vmatpush1.xpose.msra.mxu0 0.0
        %849 = vmatprep.subr.mxu0 0.0
        %850 = vmatpush1.xpose.msra.mxu0 0.0
        %851 = vmatprep.subr.mxu0 0.0
        %852 = vmatpush1.xpose.msra.mxu0 0.0
        %853 = vmatprep.subr.mxu0 0.0
        %854 = vmatpush1.xpose.msra.mxu0 0.0
        %855 = vmatprep.subr.mxu0 0.0
        %856 = vmatpush1.xpose.msra.mxu0 0.0
        %857 = vmatprep.subr.mxu0 0.0
        %858 = vmatpush1.xpose.msra.mxu0 0.0
        %859 = vmatprep.subr.mxu0 0.0
        %860 = vmatpush1.xpose.msra.mxu0 0.0
        %861 = vmatprep.subr.mxu0 0.0
        %862 = vmatpush1.xpose.msra.mxu0 0.0
        %863 = vmatprep.subr.mxu0 0.0
        %864 = vmatpush1.xpose.msra.mxu0 0.0
        %865 = vmatprep.subr.mxu0 0.0
        %866 = vmatpush1.xpose.msra.mxu0 0.0
        %867 = vmatprep.subr.mxu0 0.0
        %868 = vmatpush1.xpose.msra.mxu0 0.0
        %869 = vmatprep.subr.mxu0 0.0
        %870 = vmatpush1.xpose.msra.mxu0 0.0
        %871 = vmatprep.subr.mxu0 0.0
        %872 = vmatpush1.xpose.msra.mxu0 0.0
        %873 = vmatprep.subr.mxu0 0.0
        %874 = vmatpush1.xpose.msra.mxu0 0.0
        %875 = vmatprep.subr.mxu0 0.0
        %876 = vmatpush1.xpose.msra.mxu0 0.0
        %877 = vmatprep.subr.mxu0 0.0
        %878 = vmatpush1.xpose.msra.mxu0 0.0
        %879 = vmatprep.subr.mxu0 0.0
        %880 = vmatpush1.xpose.msra.mxu0 0.0
        %881 = vmatprep.subr.mxu0 0.0
        %882 = vmatpush1.xpose.msra.mxu0 0.0
        %883 = vmatprep.subr.mxu0 0.0
        %884 = vmatpush1.xpose.msra.mxu0 0.0
        %885 = vmatprep.subr.mxu0 0.0
        %886 = vmatpush1.xpose.msra.mxu0 0.0
        %887 = vmatprep.subr.mxu0 0.0
        %888 = vmatpush1.xpose.msra.mxu0 0.0
        %889 = vmatprep.subr.mxu0 0.0
        %890 = vmatpush1.xpose.msra.mxu0 0.0
        %891 = vmatprep.subr.mxu0 0.0
        %892 = vmatpush1.xpose.msra.mxu0 0.0
        %893 = vmatprep.subr.mxu0 0.0
        %894 = vmatpush1.xpose.msra.mxu0 0.0
        %895 = vmatprep.subr.mxu0 0.0
        %896 = vmatpush1.xpose.msra.mxu0 0.0
        %897 = vmatprep.subr.mxu0 0.0
        %898 = vmatpush1.xpose.msra.mxu0 0.0
        %899 = vmatprep.subr.mxu0 0.0
        %900 = vmatpush1.xpose.msra.mxu0 0.0
        %901 = vmatprep.subr.mxu0 0.0
        %902 = vmatpush1.xpose.msra.mxu0 0.0
        %903 = vmatprep.subr.mxu0 0.0
        %904 = vmatpush1.xpose.msra.mxu0 0.0
        %905 = vmatprep.subr.mxu0 0.0
        %906 = vmatpush1.xpose.msra.mxu0 0.0
        %907 = vmatprep.subr.mxu0 0.0
        %908 = vmatpush1.xpose.msra.mxu0 0.0
        %909 = vmatprep.mubr.f32.mxu0 0.0
        %910 = vmatmul.mubr.f32.gmra.mrb[0].mxu0 %v841
        %v911 = vpop.f32.mrb[0].mxu0
        %v912 = vadd.f32 0.0, %v911
        %v913 = vpop.f32.mrb[0].mxu0
        %914 = vdwg.mxu0
        %v915 = vsel %vm748, %v912, -inf
        %916 = vmax.xlane.f32.xlu0 %v915
        %v917 = vpop.xlane.xlu0 %916
        %v918 = vsub.f32 %v912, %v917
        %v919 = vmul.f32 %v918, 1.442695
        %v920 = vpow.pop %v919
        %v921 = vsel %vm748, %v920, 0.0
        %922 = vadd.xlane.f32.xlu0 %v921
        %v923 = vpop.xlane.xlu0 %922
        %v924 = vrcp.pop %v923
        %v925 = vmul.f32 %v920, %v924
        %926 = vrot.lane.b32.xlu0 %v591, 64
        %v927 = vpop.permute.xlu0 %926
        %v930 = vsel %vm748, %v925, 0
        %932 = vmatprep.subr.mxu0 0.0
        %933 = vmatpush1.msra.mxu0 %v927
        %934 = vmatprep.subr.mxu0 0.0
        %935 = vmatpush1.msra.mxu0 0.0
        %936 = vmatprep.subr.mxu0 0.0
        %937 = vmatpush1.msra.mxu0 0.0
        %938 = vmatprep.subr.mxu0 0.0
        %939 = vmatpush1.msra.mxu0 0.0
        %940 = vmatprep.subr.mxu0 0.0
        %941 = vmatpush1.msra.mxu0 0.0
        %942 = vmatprep.subr.mxu0 0.0
        %943 = vmatpush1.msra.mxu0 0.0
        %944 = vmatprep.subr.mxu0 0.0
        %945 = vmatpush1.msra.mxu0 0.0
        %946 = vmatprep.subr.mxu0 0.0
        %947 = vmatpush1.msra.mxu0 0.0
        %948 = vmatprep.subr.mxu0 0.0
        %949 = vmatpush1.msra.mxu0 0.0
        %950 = vmatprep.subr.mxu0 0.0
        %951 = vmatpush1.msra.mxu0 0.0
        %952 = vmatprep.subr.mxu0 0.0
        %953 = vmatpush1.msra.mxu0 0.0
        %954 = vmatprep.subr.mxu0 0.0
        %955 = vmatpush1.msra.mxu0 0.0
        %956 = vmatprep.subr.mxu0 0.0
        %957 = vmatpush1.msra.mxu0 0.0
        %958 = vmatprep.subr.mxu0 0.0
        %959 = vmatpush1.msra.mxu0 0.0
        %960 = vmatprep.subr.mxu0 0.0
        %961 = vmatpush1.msra.mxu0 0.0
        %962 = vmatprep.subr.mxu0 0.0
        %963 = vmatpush1.msra.mxu0 0.0
        %964 = vmatprep.subr.mxu0 0.0
        %965 = vmatpush1.msra.mxu0 0.0
        %966 = vmatprep.subr.mxu0 0.0
        %967 = vmatpush1.msra.mxu0 0.0
        %968 = vmatprep.subr.mxu0 0.0
        %969 = vmatpush1.msra.mxu0 0.0
        %970 = vmatprep.subr.mxu0 0.0
        %971 = vmatpush1.msra.mxu0 0.0
        %972 = vmatprep.subr.mxu0 0.0
        %973 = vmatpush1.msra.mxu0 0.0
        %974 = vmatprep.subr.mxu0 0.0
        %975 = vmatpush1.msra.mxu0 0.0
        %976 = vmatprep.subr.mxu0 0.0
        %977 = vmatpush1.msra.mxu0 0.0
        %978 = vmatprep.subr.mxu0 0.0
        %979 = vmatpush1.msra.mxu0 0.0
        %980 = vmatprep.subr.mxu0 0.0
        %981 = vmatpush1.msra.mxu0 0.0
        %982 = vmatprep.subr.mxu0 0.0
        %983 = vmatpush1.msra.mxu0 0.0
        %984 = vmatprep.subr.mxu0 0.0
        %985 = vmatpush1.msra.mxu0 0.0
        %986 = vmatprep.subr.mxu0 0.0
        %987 = vmatpush1.msra.mxu0 0.0
        %988 = vmatprep.subr.mxu0 0.0
        %989 = vmatpush1.msra.mxu0 0.0
        %990 = vmatprep.subr.mxu0 0.0
        %991 = vmatpush1.msra.mxu0 0.0
        %992 = vmatprep.subr.mxu0 0.0
        %993 = vmatpush1.msra.mxu0 0.0
        %994 = vmatprep.subr.mxu0 0.0
        %995 = vmatpush1.msra.mxu0 0.0
        %996 = vmatprep.mubr.f32.mxu0 0.0
        %997 = vmatmul.mubr.f32.gmra.mrb[0].mxu0 %v930
        %v998 = vpop.f32.mrb[0].mxu0
        %v999 = vadd.f32 0.0, %v998
        %v1000 = vpop.f32.mrb[0].mxu0
        %1001 = vdwg.mxu0
        %1002 = vrot.lane.b32.xlu0 %v667, 112
        %v1003 = vpop.permute.xlu0 %1002
        %1004 = vrot.lane.b32.xlu0 %v664, 80
        %v1005 = vpop.permute.xlu0 %1004
        %v1006 = vsel %vm672, %v1003, 0
        %v1008 = vsel %vm672, %v1005, 0
        %1010 = vmatprep.subr.mxu0 0.0
        %1011 = vmatpush1.xpose.msra.mxu0 %v1008
        %1012 = vmatprep.subr.mxu0 0.0
        %1013 = vmatpush1.xpose.msra.mxu0 0.0
        %1014 = vmatprep.subr.mxu0 0.0
        %1015 = vmatpush1.xpose.msra.mxu0 0.0
        %1016 = vmatprep.subr.mxu0 0.0
        %1017 = vmatpush1.xpose.msra.mxu0 0.0
        %1018 = vmatprep.subr.mxu0 0.0
        %1019 = vmatpush1.xpose.msra.mxu0 0.0
        %1020 = vmatprep.subr.mxu0 0.0
        %1021 = vmatpush1.xpose.msra.mxu0 0.0
        %1022 = vmatprep.subr.mxu0 0.0
        %1023 = vmatpush1.xpose.msra.mxu0 0.0
        %1024 = vmatprep.subr.mxu0 0.0
        %1025 = vmatpush1.xpose.msra.mxu0 0.0
        %1026 = vmatprep.subr.mxu0 0.0
        %1027 = vmatpush1.xpose.msra.mxu0 0.0
        %1028 = vmatprep.subr.mxu0 0.0
        %1029 = vmatpush1.xpose.msra.mxu0 0.0
        %1030 = vmatprep.subr.mxu0 0.0
        %1031 = vmatpush1.xpose.msra.mxu0 0.0
        %1032 = vmatprep.subr.mxu0 0.0
        %1033 = vmatpush1.xpose.msra.mxu0 0.0
        %1034 = vmatprep.subr.mxu0 0.0
        %1035 = vmatpush1.xpose.msra.mxu0 0.0
        %1036 = vmatprep.subr.mxu0 0.0
        %1037 = vmatpush1.xpose.msra.mxu0 0.0
        %1038 = vmatprep.subr.mxu0 0.0
        %1039 = vmatpush1.xpose.msra.mxu0 0.0
        %1040 = vmatprep.subr.mxu0 0.0
        %1041 = vmatpush1.xpose.msra.mxu0 0.0
        %1042 = vmatprep.subr.mxu0 0.0
        %1043 = vmatpush1.xpose.msra.mxu0 0.0
        %1044 = vmatprep.subr.mxu0 0.0
        %1045 = vmatpush1.xpose.msra.mxu0 0.0
        %1046 = vmatprep.subr.mxu0 0.0
        %1047 = vmatpush1.xpose.msra.mxu0 0.0
        %1048 = vmatprep.subr.mxu0 0.0
        %1049 = vmatpush1.xpose.msra.mxu0 0.0
        %1050 = vmatprep.subr.mxu0 0.0
        %1051 = vmatpush1.xpose.msra.mxu0 0.0
        %1052 = vmatprep.subr.mxu0 0.0
        %1053 = vmatpush1.xpose.msra.mxu0 0.0
        %1054 = vmatprep.subr.mxu0 0.0
        %1055 = vmatpush1.xpose.msra.mxu0 0.0
        %1056 = vmatprep.subr.mxu0 0.0
        %1057 = vmatpush1.xpose.msra.mxu0 0.0
        %1058 = vmatprep.subr.mxu0 0.0
        %1059 = vmatpush1.xpose.msra.mxu0 0.0
        %1060 = vmatprep.subr.mxu0 0.0
        %1061 = vmatpush1.xpose.msra.mxu0 0.0
        %1062 = vmatprep.subr.mxu0 0.0
        %1063 = vmatpush1.xpose.msra.mxu0 0.0
        %1064 = vmatprep.subr.mxu0 0.0
        %1065 = vmatpush1.xpose.msra.mxu0 0.0
        %1066 = vmatprep.subr.mxu0 0.0
        %1067 = vmatpush1.xpose.msra.mxu0 0.0
        %1068 = vmatprep.subr.mxu0 0.0
        %1069 = vmatpush1.xpose.msra.mxu0 0.0
        %1070 = vmatprep.subr.mxu0 0.0
        %1071 = vmatpush1.xpose.msra.mxu0 0.0
        %1072 = vmatprep.subr.mxu0 0.0
        %1073 = vmatpush1.xpose.msra.mxu0 0.0
        %1074 = vmatprep.mubr.f32.mxu0 0.0
        %1075 = vmatmul.mubr.f32.gmra.mrb[0].mxu0 %v1006
        %v1076 = vpop.f32.mrb[0].mxu0
        %v1077 = vadd.f32 0.0, %v1076
        %v1078 = vpop.f32.mrb[0].mxu0
        %1079 = vdwg.mxu0
        %v1080 = vsel %vm748, %v1077, -inf
        %1081 = vmax.xlane.f32.xlu0 %v1080
        %v1082 = vpop.xlane.xlu0 %1081
        %v1083 = vsub.f32 %v1077, %v1082
        %v1084 = vmul.f32 %v1083, 1.442695
        %v1085 = vpow.pop %v1084
        %v1086 = vsel %vm748, %v1085, 0.0
        %1087 = vadd.xlane.f32.xlu0 %v1086
        %v1088 = vpop.xlane.xlu0 %1087
        %v1089 = vrcp.pop %v1088
        %v1090 = vmul.f32 %v1085, %v1089
        %s1091 = scalar_lea.vmem %s488, 8 [#allocation6]
        %1092 = vst.msk [vmem:[%s1091] sm:$0xff] %vm748, %v1090
        %1093 = vrot.lane.b32.xlu0 %v664, 48
        %v1094 = vpop.permute.xlu0 %1093
        %v1097 = vsel %vm748, %v1090, 0
        %1099 = vmatprep.subr.mxu0 0.0
        %1100 = vmatpush1.msra.mxu0 %v1094
        %1101 = vmatprep.subr.mxu0 0.0
        %1102 = vmatpush1.msra.mxu0 0.0
        %1103 = vmatprep.subr.mxu0 0.0
        %1104 = vmatpush1.msra.mxu0 0.0
        %1105 = vmatprep.subr.mxu0 0.0
        %1106 = vmatpush1.msra.mxu0 0.0
        %1107 = vmatprep.subr.mxu0 0.0
        %1108 = vmatpush1.msra.mxu0 0.0
        %1109 = vmatprep.subr.mxu0 0.0
        %1110 = vmatpush1.msra.mxu0 0.0
        %1111 = vmatprep.subr.mxu0 0.0
        %1112 = vmatpush1.msra.mxu0 0.0
        %1113 = vmatprep.subr.mxu0 0.0
        %1114 = vmatpush1.msra.mxu0 0.0
        %1115 = vmatprep.subr.mxu0 0.0
        %1116 = vmatpush1.msra.mxu0 0.0
        %1117 = vmatprep.subr.mxu0 0.0
        %1118 = vmatpush1.msra.mxu0 0.0
        %1119 = vmatprep.subr.mxu0 0.0
        %1120 = vmatpush1.msra.mxu0 0.0
        %1121 = vmatprep.subr.mxu0 0.0
        %1122 = vmatpush1.msra.mxu0 0.0
        %1123 = vmatprep.subr.mxu0 0.0
        %1124 = vmatpush1.msra.mxu0 0.0
        %1125 = vmatprep.subr.mxu0 0.0
        %1126 = vmatpush1.msra.mxu0 0.0
        %1127 = vmatprep.subr.mxu0 0.0
        %1128 = vmatpush1.msra.mxu0 0.0
        %1129 = vmatprep.subr.mxu0 0.0
        %1130 = vmatpush1.msra.mxu0 0.0
        %1131 = vmatprep.subr.mxu0 0.0
        %1132 = vmatpush1.msra.mxu0 0.0
        %1133 = vmatprep.subr.mxu0 0.0
        %1134 = vmatpush1.msra.mxu0 0.0
        %1135 = vmatprep.subr.mxu0 0.0
        %1136 = vmatpush1.msra.mxu0 0.0
        %1137 = vmatprep.subr.mxu0 0.0
        %1138 = vmatpush1.msra.mxu0 0.0
        %1139 = vmatprep.subr.mxu0 0.0
        %1140 = vmatpush1.msra.mxu0 0.0
        %1141 = vmatprep.subr.mxu0 0.0
        %1142 = vmatpush1.msra.mxu0 0.0
        %1143 = vmatprep.subr.mxu0 0.0
        %1144 = vmatpush1.msra.mxu0 0.0
        %1145 = vmatprep.subr.mxu0 0.0
        %1146 = vmatpush1.msra.mxu0 0.0
        %1147 = vmatprep.subr.mxu0 0.0
        %1148 = vmatpush1.msra.mxu0 0.0
        %1149 = vmatprep.subr.mxu0 0.0
        %1150 = vmatpush1.msra.mxu0 0.0
        %1151 = vmatprep.subr.mxu0 0.0
        %1152 = vmatpush1.msra.mxu0 0.0
        %1153 = vmatprep.subr.mxu0 0.0
        %1154 = vmatpush1.msra.mxu0 0.0
        %1155 = vmatprep.subr.mxu0 0.0
        %1156 = vmatpush1.msra.mxu0 0.0
        %1157 = vmatprep.subr.mxu0 0.0
        %1158 = vmatpush1.msra.mxu0 0.0
        %1159 = vmatprep.subr.mxu0 0.0
        %1160 = vmatpush1.msra.mxu0 0.0
        %1161 = vmatprep.subr.mxu0 0.0
        %1162 = vmatpush1.msra.mxu0 0.0
        %1163 = vmatprep.mubr.f32.mxu0 0.0
        %1164 = vmatmul.mubr.f32.gmra.mrb[0].mxu0 %v1097
        %v1165 = vpop.f32.mrb[0].mxu0
        %v1166 = vadd.f32 0.0, %v1165
        %v1167 = vpop.f32.mrb[0].mxu0
        %1168 = vdwg.mxu0
        %1169 = vrot.lane.b32.xlu0 %v668, 112
        %v1170 = vpop.permute.xlu0 %1169
        %1171 = vrot.lane.b32.xlu0 %v591, 80
        %v1172 = vpop.permute.xlu0 %1171
        %v1173 = vsel %vm672, %v1170, 0
        %v1175 = vsel %vm672, %v1172, 0
        %1177 = vmatprep.subr.mxu0 0.0
        %1178 = vmatpush1.xpose.msra.mxu0 %v1175
        %1179 = vmatprep.subr.mxu0 0.0
        %1180 = vmatpush1.xpose.msra.mxu0 0.0
        %1181 = vmatprep.subr.mxu0 0.0
        %1182 = vmatpush1.xpose.msra.mxu0 0.0
        %1183 = vmatprep.subr.mxu0 0.0
        %1184 = vmatpush1.xpose.msra.mxu0 0.0
        %1185 = vmatprep.subr.mxu0 0.0
        %1186 = vmatpush1.xpose.msra.mxu0 0.0
        %1187 = vmatprep.subr.mxu0 0.0
        %1188 = vmatpush1.xpose.msra.mxu0 0.0
        %1189 = vmatprep.subr.mxu0 0.0
        %1190 = vmatpush1.xpose.msra.mxu0 0.0
        %1191 = vmatprep.subr.mxu0 0.0
        %1192 = vmatpush1.xpose.msra.mxu0 0.0
        %1193 = vmatprep.subr.mxu0 0.0
        %1194 = vmatpush1.xpose.msra.mxu0 0.0
        %1195 = vmatprep.subr.mxu0 0.0
        %1196 = vmatpush1.xpose.msra.mxu0 0.0
        %1197 = vmatprep.subr.mxu0 0.0
        %1198 = vmatpush1.xpose.msra.mxu0 0.0
        %1199 = vmatprep.subr.mxu0 0.0
        %1200 = vmatpush1.xpose.msra.mxu0 0.0
        %1201 = vmatprep.subr.mxu0 0.0
        %1202 = vmatpush1.xpose.msra.mxu0 0.0
        %1203 = vmatprep.subr.mxu0 0.0
        %1204 = vmatpush1.xpose.msra.mxu0 0.0
        %1205 = vmatprep.subr.mxu0 0.0
        %1206 = vmatpush1.xpose.msra.mxu0 0.0
        %1207 = vmatprep.subr.mxu0 0.0
        %1208 = vmatpush1.xpose.msra.mxu0 0.0
        %1209 = vmatprep.subr.mxu0 0.0
        %1210 = vmatpush1.xpose.msra.mxu0 0.0
        %1211 = vmatprep.subr.mxu0 0.0
        %1212 = vmatpush1.xpose.msra.mxu0 0.0
        %1213 = vmatprep.subr.mxu0 0.0
        %1214 = vmatpush1.xpose.msra.mxu0 0.0
        %1215 = vmatprep.subr.mxu0 0.0
        %1216 = vmatpush1.xpose.msra.mxu0 0.0
        %1217 = vmatprep.subr.mxu0 0.0
        %1218 = vmatpush1.xpose.msra.mxu0 0.0
        %1219 = vmatprep.subr.mxu0 0.0
        %1220 = vmatpush1.xpose.msra.mxu0 0.0
        %1221 = vmatprep.subr.mxu0 0.0
        %1222 = vmatpush1.xpose.msra.mxu0 0.0
        %1223 = vmatprep.subr.mxu0 0.0
        %1224 = vmatpush1.xpose.msra.mxu0 0.0
        %1225 = vmatprep.subr.mxu0 0.0
        %1226 = vmatpush1.xpose.msra.mxu0 0.0
        %1227 = vmatprep.subr.mxu0 0.0
        %1228 = vmatpush1.xpose.msra.mxu0 0.0
        %1229 = vmatprep.subr.mxu0 0.0
        %1230 = vmatpush1.xpose.msra.mxu0 0.0
        %1231 = vmatprep.subr.mxu0 0.0
        %1232 = vmatpush1.xpose.msra.mxu0 0.0
        %1233 = vmatprep.subr.mxu0 0.0
        %1234 = vmatpush1.xpose.msra.mxu0 0.0
        %1235 = vmatprep.subr.mxu0 0.0
        %1236 = vmatpush1.xpose.msra.mxu0 0.0
        %1237 = vmatprep.subr.mxu0 0.0
        %1238 = vmatpush1.xpose.msra.mxu0 0.0
        %1239 = vmatprep.subr.mxu0 0.0
        %1240 = vmatpush1.xpose.msra.mxu0 0.0
        %1241 = vmatprep.mubr.f32.mxu0 0.0
        %1242 = vmatmul.mubr.f32.gmra.mrb[0].mxu0 %v1173
        %v1243 = vpop.f32.mrb[0].mxu0
        %v1244 = vadd.f32 0.0, %v1243
        %v1245 = vpop.f32.mrb[0].mxu0
        %1246 = vdwg.mxu0
        %v1247 = vsel %vm748, %v1244, -inf
        %1248 = vmax.xlane.f32.xlu0 %v1247
        %v1249 = vpop.xlane.xlu0 %1248
        %v1250 = vsub.f32 %v1244, %v1249
        %v1251 = vmul.f32 %v1250, 1.442695
        %v1252 = vpow.pop %v1251
        %v1253 = vsel %vm748, %v1252, 0.0
        %1254 = vadd.xlane.f32.xlu0 %v1253
        %v1255 = vpop.xlane.xlu0 %1254
        %v1256 = vrcp.pop %v1255
        %v1257 = vmul.f32 %v1252, %v1256
        %1258 = vrot.lane.b32.xlu0 %v591, 48
        %v1259 = vpop.permute.xlu0 %1258
        %v1262 = vsel %vm748, %v1257, 0
        %1264 = vmatprep.subr.mxu0 0.0
        %1265 = vmatpush1.msra.mxu0 %v1259
        %1266 = vmatprep.subr.mxu0 0.0
        %1267 = vmatpush1.msra.mxu0 0.0
        %1268 = vmatprep.subr.mxu0 0.0
        %1269 = vmatpush1.msra.mxu0 0.0
        %1270 = vmatprep.subr.mxu0 0.0
        %1271 = vmatpush1.msra.mxu0 0.0
        %1272 = vmatprep.subr.mxu0 0.0
        %1273 = vmatpush1.msra.mxu0 0.0
        %1274 = vmatprep.subr.mxu0 0.0
        %1275 = vmatpush1.msra.mxu0 0.0
        %1276 = vmatprep.subr.mxu0 0.0
        %1277 = vmatpush1.msra.mxu0 0.0
        %1278 = vmatprep.subr.mxu0 0.0
        %1279 = vmatpush1.msra.mxu0 0.0
        %1280 = vmatprep.subr.mxu0 0.0
        %1281 = vmatpush1.msra.mxu0 0.0
        %1282 = vmatprep.subr.mxu0 0.0
        %1283 = vmatpush1.msra.mxu0 0.0
        %1284 = vmatprep.subr.mxu0 0.0
        %1285 = vmatpush1.msra.mxu0 0.0
        %1286 = vmatprep.subr.mxu0 0.0
        %1287 = vmatpush1.msra.mxu0 0.0
        %1288 = vmatprep.subr.mxu0 0.0
        %1289 = vmatpush1.msra.mxu0 0.0
        %1290 = vmatprep.subr.mxu0 0.0
        %1291 = vmatpush1.msra.mxu0 0.0
        %1292 = vmatprep.subr.mxu0 0.0
        %1293 = vmatpush1.msra.mxu0 0.0
        %1294 = vmatprep.subr.mxu0 0.0
        %1295 = vmatpush1.msra.mxu0 0.0
        %1296 = vmatprep.subr.mxu0 0.0
        %1297 = vmatpush1.msra.mxu0 0.0
        %1298 = vmatprep.subr.mxu0 0.0
        %1299 = vmatpush1.msra.mxu0 0.0
        %1300 = vmatprep.subr.mxu0 0.0
        %1301 = vmatpush1.msra.mxu0 0.0
        %1302 = vmatprep.subr.mxu0 0.0
        %1303 = vmatpush1.msra.mxu0 0.0
        %1304 = vmatprep.subr.mxu0 0.0
        %1305 = vmatpush1.msra.mxu0 0.0
        %1306 = vmatprep.subr.mxu0 0.0
        %1307 = vmatpush1.msra.mxu0 0.0
        %1308 = vmatprep.subr.mxu0 0.0
        %1309 = vmatpush1.msra.mxu0 0.0
        %1310 = vmatprep.subr.mxu0 0.0
        %1311 = vmatpush1.msra.mxu0 0.0
        %1312 = vmatprep.subr.mxu0 0.0
        %1313 = vmatpush1.msra.mxu0 0.0
        %1314 = vmatprep.subr.mxu0 0.0
        %1315 = vmatpush1.msra.mxu0 0.0
        %1316 = vmatprep.subr.mxu0 0.0
        %1317 = vmatpush1.msra.mxu0 0.0
        %1318 = vmatprep.subr.mxu0 0.0
        %1319 = vmatpush1.msra.mxu0 0.0
        %1320 = vmatprep.subr.mxu0 0.0
        %1321 = vmatpush1.msra.mxu0 0.0
        %1322 = vmatprep.subr.mxu0 0.0
        %1323 = vmatpush1.msra.mxu0 0.0
        %1324 = vmatprep.subr.mxu0 0.0
        %1325 = vmatpush1.msra.mxu0 0.0
        %1326 = vmatprep.subr.mxu0 0.0
        %1327 = vmatpush1.msra.mxu0 0.0
        %1328 = vmatprep.mubr.f32.mxu0 0.0
        %1329 = vmatmul.mubr.f32.gmra.mrb[0].mxu0 %v1262
        %v1330 = vpop.f32.mrb[0].mxu0
        %v1331 = vadd.f32 0.0, %v1330
        %v1332 = vpop.f32.mrb[0].mxu0
        %1333 = vdwg.mxu0
        %v1334 = vld [vmem:[%s7] sm:$0x1]
        %v1335 = vld [vmem:[%s7 + $0x1] sm:$0x1]
        %v1336 = vld [vmem:[%s7 + $0x2] sm:$0x1]
        %v1337 = vld [vmem:[%s7 + $0x3] sm:$0x1]
        %v1338 = vld [vmem:[%s7 + $0x4] sm:$0x1]
        %v1339 = vld [vmem:[%s7 + $0x5] sm:$0x1]
        %v1340 = vld [vmem:[%s6] sm:$0xff]
        %v1341 = vld [vmem:[%s6 + $0x8] sm:$0xff]
        %v1343 = vsel %vm672, %v834, 0
        %1345 = vmatprep.subr.mxu0 0.0
        %1346 = vmatpush1.msra.mxu0 %v1340
        %1347 = vmatprep.subr.mxu0 0.0
        %1348 = vmatpush1.msra.mxu0 %v1341
        %1349 = vmatprep.subr.mxu0 0.0
        %1350 = vmatpush1.msra.mxu0 0.0
        %1351 = vmatprep.subr.mxu0 0.0
        %1352 = vmatpush1.msra.mxu0 0.0
        %1353 = vmatprep.subr.mxu0 0.0
        %1354 = vmatpush1.msra.mxu0 0.0
        %1355 = vmatprep.subr.mxu0 0.0
        %1356 = vmatpush1.msra.mxu0 0.0
        %1357 = vmatprep.subr.mxu0 0.0
        %1358 = vmatpush1.msra.mxu0 0.0
        %1359 = vmatprep.subr.mxu0 0.0
        %1360 = vmatpush1.msra.mxu0 0.0
        %1361 = vmatprep.subr.mxu0 0.0
        %1362 = vmatpush1.msra.mxu0 0.0
        %1363 = vmatprep.subr.mxu0 0.0
        %1364 = vmatpush1.msra.mxu0 0.0
        %1365 = vmatprep.subr.mxu0 0.0
        %1366 = vmatpush1.msra.mxu0 0.0
        %1367 = vmatprep.subr.mxu0 0.0
        %1368 = vmatpush1.msra.mxu0 0.0
        %1369 = vmatprep.subr.mxu0 0.0
        %1370 = vmatpush1.msra.mxu0 0.0
        %1371 = vmatprep.subr.mxu0 0.0
        %1372 = vmatpush1.msra.mxu0 0.0
        %1373 = vmatprep.subr.mxu0 0.0
        %1374 = vmatpush1.msra.mxu0 0.0
        %1375 = vmatprep.subr.mxu0 0.0
        %1376 = vmatpush1.msra.mxu0 0.0
        %1377 = vmatprep.subr.mxu0 0.0
        %1378 = vmatpush1.msra.mxu0 0.0
        %1379 = vmatprep.subr.mxu0 0.0
        %1380 = vmatpush1.msra.mxu0 0.0
        %1381 = vmatprep.subr.mxu0 0.0
        %1382 = vmatpush1.msra.mxu0 0.0
        %1383 = vmatprep.subr.mxu0 0.0
        %1384 = vmatpush1.msra.mxu0 0.0
        %1385 = vmatprep.subr.mxu0 0.0
        %1386 = vmatpush1.msra.mxu0 0.0
        %1387 = vmatprep.subr.mxu0 0.0
        %1388 = vmatpush1.msra.mxu0 0.0
        %1389 = vmatprep.subr.mxu0 0.0
        %1390 = vmatpush1.msra.mxu0 0.0
        %1391 = vmatprep.subr.mxu0 0.0
        %1392 = vmatpush1.msra.mxu0 0.0
        %1393 = vmatprep.subr.mxu0 0.0
        %1394 = vmatpush1.msra.mxu0 0.0
        %1395 = vmatprep.subr.mxu0 0.0
        %1396 = vmatpush1.msra.mxu0 0.0
        %1397 = vmatprep.subr.mxu0 0.0
        %1398 = vmatpush1.msra.mxu0 0.0
        %1399 = vmatprep.subr.mxu0 0.0
        %1400 = vmatpush1.msra.mxu0 0.0
        %1401 = vmatprep.subr.mxu0 0.0
        %1402 = vmatpush1.msra.mxu0 0.0
        %1403 = vmatprep.subr.mxu0 0.0
        %1404 = vmatpush1.msra.mxu0 0.0
        %1405 = vmatprep.subr.mxu0 0.0
        %1406 = vmatpush1.msra.mxu0 0.0
        %1407 = vmatprep.subr.mxu0 0.0
        %1408 = vmatpush1.msra.mxu0 0.0
        %1409 = vmatprep.mubr.f32.mxu0 0.0
        %1410 = vmatmul.mubr.f32.gmra.mrb[0].mxu0 %v1343
        %v1411 = vpop.f32.mrb[0].mxu0
        %v1412 = vadd.f32 0.0, %v1411
        %v1413 = vpop.f32.mrb[0].mxu0
        %1414 = vdwg.mxu0
        %v1415 = vlaneseq
        %v1416 = vshrl.u32 %v1415, 7
        %v1417 = vsub.s32 0, %v1416
        %v1418 = vrot.slane %v1334, %v1417
        %v1419 = vadd.f32 %v1418, %v1412
        %v1420 = vld [vmem:[%s6 + $0x10] sm:$0xff]
        %v1421 = vld [vmem:[%s6 + $0x18] sm:$0xff]
        %v1423 = vsel %vm672, %v1166, 0
        %1425 = vmatprep.subr.mxu0 0.0
        %1426 = vmatpush1.msra.mxu0 %v1420
        %1427 = vmatprep.subr.mxu0 0.0
        %1428 = vmatpush1.msra.mxu0 %v1421
        %1429 = vmatprep.subr.mxu0 0.0
        %1430 = vmatpush1.msra.mxu0 0.0
        %1431 = vmatprep.subr.mxu0 0.0
        %1432 = vmatpush1.msra.mxu0 0.0
        %1433 = vmatprep.subr.mxu0 0.0
        %1434 = vmatpush1.msra.mxu0 0.0
        %1435 = vmatprep.subr.mxu0 0.0
        %1436 = vmatpush1.msra.mxu0 0.0
        %1437 = vmatprep.subr.mxu0 0.0
        %1438 = vmatpush1.msra.mxu0 0.0
        %1439 = vmatprep.subr.mxu0 0.0
        %1440 = vmatpush1.msra.mxu0 0.0
        %1441 = vmatprep.subr.mxu0 0.0
        %1442 = vmatpush1.msra.mxu0 0.0
        %1443 = vmatprep.subr.mxu0 0.0
        %1444 = vmatpush1.msra.mxu0 0.0
        %1445 = vmatprep.subr.mxu0 0.0
        %1446 = vmatpush1.msra.mxu0 0.0
        %1447 = vmatprep.subr.mxu0 0.0
        %1448 = vmatpush1.msra.mxu0 0.0
        %1449 = vmatprep.subr.mxu0 0.0
        %1450 = vmatpush1.msra.mxu0 0.0
        %1451 = vmatprep.subr.mxu0 0.0
        %1452 = vmatpush1.msra.mxu0 0.0
        %1453 = vmatprep.subr.mxu0 0.0
        %1454 = vmatpush1.msra.mxu0 0.0
        %1455 = vmatprep.subr.mxu0 0.0
        %1456 = vmatpush1.msra.mxu0 0.0
        %1457 = vmatprep.subr.mxu0 0.0
        %1458 = vmatpush1.msra.mxu0 0.0
        %1459 = vmatprep.subr.mxu0 0.0
        %1460 = vmatpush1.msra.mxu0 0.0
        %1461 = vmatprep.subr.mxu0 0.0
        %1462 = vmatpush1.msra.mxu0 0.0
        %1463 = vmatprep.subr.mxu0 0.0
        %1464 = vmatpush1.msra.mxu0 0.0
        %1465 = vmatprep.subr.mxu0 0.0
        %1466 = vmatpush1.msra.mxu0 0.0
        %1467 = vmatprep.subr.mxu0 0.0
        %1468 = vmatpush1.msra.mxu0 0.0
        %1469 = vmatprep.subr.mxu0 0.0
        %1470 = vmatpush1.msra.mxu0 0.0
        %1471 = vmatprep.subr.mxu0 0.0
        %1472 = vmatpush1.msra.mxu0 0.0
        %1473 = vmatprep.subr.mxu0 0.0
        %1474 = vmatpush1.msra.mxu0 0.0
        %1475 = vmatprep.subr.mxu0 0.0
        %1476 = vmatpush1.msra.mxu0 0.0
        %1477 = vmatprep.subr.mxu0 0.0
        %1478 = vmatpush1.msra.mxu0 0.0
        %1479 = vmatprep.subr.mxu0 0.0
        %1480 = vmatpush1.msra.mxu0 0.0
        %1481 = vmatprep.subr.mxu0 0.0
        %1482 = vmatpush1.msra.mxu0 0.0
        %1483 = vmatprep.subr.mxu0 0.0
        %1484 = vmatpush1.msra.mxu0 0.0
        %1485 = vmatprep.subr.mxu0 0.0
        %1486 = vmatpush1.msra.mxu0 0.0
        %1487 = vmatprep.subr.mxu0 0.0
        %1488 = vmatpush1.msra.mxu0 0.0
        %1489 = vmatprep.mubr.f32.mxu0 0.0
        %1490 = vmatmul.mubr.f32.gmra.mrb[0].mxu0 %v1423
        %v1491 = vpop.f32.mrb[0].mxu0
        %v1492 = vadd.f32 0.0, %v1491
        %v1493 = vpop.f32.mrb[0].mxu0
        %1494 = vdwg.mxu0
        %v1495 = vadd.f32 %v1419, %v1492
        %v1496 = vadd.f32 %v1495, %v505
        %v1497 = vsel %vm520, %v1496, 0.0
        %1498 = vadd.xlane.f32.xlu0 %v1497
        %v1499 = vpop.xlane.xlu0 %1498
        %v1500 = vrcp.pop 32.0
        %v1501 = vmul.f32 %v1499, %v1500
        %v1502 = vsub.f32 %v1496, %v1501
        %v1503 = vmul.f32 %v1502, %v1502
        %v1504 = vsel %vm520, %v1503, 0.0
        %1505 = vadd.xlane.f32.xlu0 %v1504
        %v1506 = vpop.xlane.xlu0 %1505
        %v1507 = vmul.f32 %v1506, %v1500
        %v1508 = vadd.f32 %v1507, 1e-05
        %v1509 = vrsqrt.pop %v1508
        %v1510 = vmul.f32 %v1502, %v1509
        %v1511 = vlaneseq
        %v1512 = vshrl.u32 %v1511, 7
        %v1513 = vsub.s32 0, %v1512
        %v1514 = vrot.slane %v1335, %v1513
        %v1515 = vmul.f32 %v1510, %v1514
        %v1516 = vlaneseq
        %v1517 = vshrl.u32 %v1516, 7
        %v1518 = vsub.s32 0, %v1517
        %v1519 = vrot.slane %v1336, %v1518
        %v1520 = vadd.f32 %v1515, %v1519
        %1522 = vset.pattern.permute.xlu0 0
        %1523 = vperm.xlu0 %1522, %v507
        %v1524 = vpop.permute.xlu0 %1523
        %v1526 = vmul.f32 %v1520, %v1524
        %v1527 = vld [vmem:[%s8] sm:$0xff]
        %v1528 = vld [vmem:[%s8 + $0x8] sm:$0xff]
        %v1529 = vld [vmem:[%s8 + $0x10] sm:$0xff]
        %v1530 = vld [vmem:[%s8 + $0x18] sm:$0xff]
        %v1531 = vld [vmem:[%s9] sm:$0x1]
        %v1533 = vlaneseq
        %v1534 = vshrl.u32 %v1533, 7
        %v1535 = vsub.s32 0, %v1534
        %v1536 = vrot.slane %v1531, %v1535
        %v1539 = vsel %vm520, %v1526, 0
        %1541 = vmatprep.subr.mxu0 0.0
        %1542 = vmatpush1.msra.mxu0 %v1527
        %1543 = vmatprep.subr.mxu0 0.0
        %1544 = vmatpush1.msra.mxu0 %v1528
        %1545 = vmatprep.subr.mxu0 0.0
        %1546 = vmatpush1.msra.mxu0 %v1529
        %1547 = vmatprep.subr.mxu0 0.0
        %1548 = vmatpush1.msra.mxu0 %v1530
        %1549 = vmatprep.subr.mxu0 0.0
        %1550 = vmatpush1.msra.mxu0 0.0
        %1551 = vmatprep.subr.mxu0 0.0
        %1552 = vmatpush1.msra.mxu0 0.0
        %1553 = vmatprep.subr.mxu0 0.0
        %1554 = vmatpush1.msra.mxu0 0.0
        %1555 = vmatprep.subr.mxu0 0.0
        %1556 = vmatpush1.msra.mxu0 0.0
        %1557 = vmatprep.subr.mxu0 0.0
        %1558 = vmatpush1.msra.mxu0 0.0
        %1559 = vmatprep.subr.mxu0 0.0
        %1560 = vmatpush1.msra.mxu0 0.0
        %1561 = vmatprep.subr.mxu0 0.0
        %1562 = vmatpush1.msra.mxu0 0.0
        %1563 = vmatprep.subr.mxu0 0.0
        %1564 = vmatpush1.msra.mxu0 0.0
        %1565 = vmatprep.subr.mxu0 0.0
        %1566 = vmatpush1.msra.mxu0 0.0
        %1567 = vmatprep.subr.mxu0 0.0
        %1568 = vmatpush1.msra.mxu0 0.0
        %1569 = vmatprep.subr.mxu0 0.0
        %1570 = vmatpush1.msra.mxu0 0.0
        %1571 = vmatprep.subr.mxu0 0.0
        %1572 = vmatpush1.msra.mxu0 0.0
        %1573 = vmatprep.subr.mxu0 0.0
        %1574 = vmatpush1.msra.mxu0 0.0
        %1575 = vmatprep.subr.mxu0 0.0
        %1576 = vmatpush1.msra.mxu0 0.0
        %1577 = vmatprep.subr.mxu0 0.0
        %1578 = vmatpush1.msra.mxu0 0.0
        %1579 = vmatprep.subr.mxu0 0.0
        %1580 = vmatpush1.msra.mxu0 0.0
        %1581 = vmatprep.subr.mxu0 0.0
        %1582 = vmatpush1.msra.mxu0 0.0
        %1583 = vmatprep.subr.mxu0 0.0
        %1584 = vmatpush1.msra.mxu0 0.0
        %1585 = vmatprep.subr.mxu0 0.0
        %1586 = vmatpush1.msra.mxu0 0.0
        %1587 = vmatprep.subr.mxu0 0.0
        %1588 = vmatpush1.msra.mxu0 0.0
        %1589 = vmatprep.subr.mxu0 0.0
        %1590 = vmatpush1.msra.mxu0 0.0
        %1591 = vmatprep.subr.mxu0 0.0
        %1592 = vmatpush1.msra.mxu0 0.0
        %1593 = vmatprep.subr.mxu0 0.0
        %1594 = vmatpush1.msra.mxu0 0.0
        %1595 = vmatprep.subr.mxu0 0.0
        %1596 = vmatpush1.msra.mxu0 0.0
        %1597 = vmatprep.subr.mxu0 0.0
        %1598 = vmatpush1.msra.mxu0 0.0
        %1599 = vmatprep.subr.mxu0 0.0
        %1600 = vmatpush1.msra.mxu0 0.0
        %1601 = vmatprep.subr.mxu0 0.0
        %1602 = vmatpush1.msra.mxu0 0.0
        %1603 = vmatprep.subr.mxu0 0.0
        %1604 = vmatpush1.msra.mxu0 0.0
        %1605 = vmatprep.mubr.f32.mxu0 0.0
        %1606 = vmatmul.mubr.f32.gmra.mrb[0].mxu0 %v1539
        %v1607 = vpop.f32.mrb[0].mxu0
        %v1608 = vadd.f32 %v1536, %v1607
        %v1609 = vpop.f32.mrb[0].mxu0
        %1610 = vdwg.mxu0
        %v1611 = vmax.f32 %v1608, 0.0
        %v1612 = vld [vmem:[%s10] sm:$0xff]
        %v1613 = vld [vmem:[%s10 + $0x8] sm:$0xff]
        %v1614 = vld [vmem:[%s10 + $0x10] sm:$0xff]
        %v1615 = vld [vmem:[%s10 + $0x18] sm:$0xff]
        %v1616 = vld [vmem:[%s10 + $0x20] sm:$0xff]
        %v1617 = vld [vmem:[%s10 + $0x28] sm:$0xff]
        %v1618 = vld [vmem:[%s10 + $0x30] sm:$0xff]
        %v1619 = vld [vmem:[%s10 + $0x38] sm:$0xff]
        %v1620 = vlaneseq
        %v1621 = vshrl.u32 %v1620, 7
        %v1622 = vsub.s32 0, %v1621
        %v1623 = vrot.slane %v1337, %v1622
        %vm1624 = vcmask 523264
        %v1626 = vsel %vm1624, %v1611, 0
        %1628 = vmatprep.subr.mxu0 0.0
        %1629 = vmatpush1.msra.mxu0 %v1612
        %1630 = vmatprep.subr.mxu0 0.0
        %1631 = vmatpush1.msra.mxu0 %v1613
        %1632 = vmatprep.subr.mxu0 0.0
        %1633 = vmatpush1.msra.mxu0 %v1614
        %1634 = vmatprep.subr.mxu0 0.0
        %1635 = vmatpush1.msra.mxu0 %v1615
        %1636 = vmatprep.subr.mxu0 0.0
        %1637 = vmatpush1.msra.mxu0 %v1616
        %1638 = vmatprep.subr.mxu0 0.0
        %1639 = vmatpush1.msra.mxu0 %v1617
        %1640 = vmatprep.subr.mxu0 0.0
        %1641 = vmatpush1.msra.mxu0 %v1618
        %1642 = vmatprep.subr.mxu0 0.0
        %1643 = vmatpush1.msra.mxu0 %v1619
        %1644 = vmatprep.subr.mxu0 0.0
        %1645 = vmatpush1.msra.mxu0 0.0
        %1646 = vmatprep.subr.mxu0 0.0
        %1647 = vmatpush1.msra.mxu0 0.0
        %1648 = vmatprep.subr.mxu0 0.0
        %1649 = vmatpush1.msra.mxu0 0.0
        %1650 = vmatprep.subr.mxu0 0.0
        %1651 = vmatpush1.msra.mxu0 0.0
        %1652 = vmatprep.subr.mxu0 0.0
        %1653 = vmatpush1.msra.mxu0 0.0
        %1654 = vmatprep.subr.mxu0 0.0
        %1655 = vmatpush1.msra.mxu0 0.0
        %1656 = vmatprep.subr.mxu0 0.0
        %1657 = vmatpush1.msra.mxu0 0.0
        %1658 = vmatprep.subr.mxu0 0.0
        %1659 = vmatpush1.msra.mxu0 0.0
        %1660 = vmatprep.subr.mxu0 0.0
        %1661 = vmatpush1.msra.mxu0 0.0
        %1662 = vmatprep.subr.mxu0 0.0
        %1663 = vmatpush1.msra.mxu0 0.0
        %1664 = vmatprep.subr.mxu0 0.0
        %1665 = vmatpush1.msra.mxu0 0.0
        %1666 = vmatprep.subr.mxu0 0.0
        %1667 = vmatpush1.msra.mxu0 0.0
        %1668 = vmatprep.subr.mxu0 0.0
        %1669 = vmatpush1.msra.mxu0 0.0
        %1670 = vmatprep.subr.mxu0 0.0
        %1671 = vmatpush1.msra.mxu0 0.0
        %1672 = vmatprep.subr.mxu0 0.0
        %1673 = vmatpush1.msra.mxu0 0.0
        %1674 = vmatprep.subr.mxu0 0.0
        %1675 = vmatpush1.msra.mxu0 0.0
        %1676 = vmatprep.subr.mxu0 0.0
        %1677 = vmatpush1.msra.mxu0 0.0
        %1678 = vmatprep.subr.mxu0 0.0
        %1679 = vmatpush1.msra.mxu0 0.0
        %1680 = vmatprep.subr.mxu0 0.0
        %1681 = vmatpush1.msra.mxu0 0.0
        %1682 = vmatprep.subr.mxu0 0.0
        %1683 = vmatpush1.msra.mxu0 0.0
        %1684 = vmatprep.subr.mxu0 0.0
        %1685 = vmatpush1.msra.mxu0 0.0
        %1686 = vmatprep.subr.mxu0 0.0
        %1687 = vmatpush1.msra.mxu0 0.0
        %1688 = vmatprep.subr.mxu0 0.0
        %1689 = vmatpush1.msra.mxu0 0.0
        %1690 = vmatprep.subr.mxu0 0.0
        %1691 = vmatpush1.msra.mxu0 0.0
        %1692 = vmatprep.mubr.f32.mxu0 0.0
        %1693 = vmatmul.mubr.f32.gmra.mrb[0].mxu0 %v1626
        %v1694 = vpop.f32.mrb[0].mxu0
        %v1695 = vadd.f32 %v1623, %v1694
        %v1696 = vpop.f32.mrb[0].mxu0
        %1697 = vdwg.mxu0
        %v1698 = vadd.f32 %v1695, %v1526
        %v1699 = vsel %vm520, %v1698, 0.0
        %1700 = vadd.xlane.f32.xlu0 %v1699
        %v1701 = vpop.xlane.xlu0 %1700
        %v1702 = vmul.f32 %v1701, %v1500
        %v1703 = vsub.f32 %v1698, %v1702
        %v1704 = vmul.f32 %v1703, %v1703
        %v1705 = vsel %vm520, %v1704, 0.0
        %1706 = vadd.xlane.f32.xlu0 %v1705
        %v1707 = vpop.xlane.xlu0 %1706
        %v1708 = vmul.f32 %v1707, %v1500
        %v1709 = vadd.f32 %v1708, 1e-05
        %v1710 = vrsqrt.pop %v1709
        %v1711 = vmul.f32 %v1703, %v1710
        %v1712 = vlaneseq
        %v1713 = vshrl.u32 %v1712, 7
        %v1714 = vsub.s32 0, %v1713
        %v1715 = vrot.slane %v1338, %v1714
        %v1716 = vmul.f32 %v1711, %v1715
        %v1717 = vlaneseq
        %v1718 = vshrl.u32 %v1717, 7
        %v1719 = vsub.s32 0, %v1718
        %v1720 = vrot.slane %v1339, %v1719
        %v1721 = vadd.f32 %v1716, %v1720
        %v1722 = vmul.f32 %v1721, %v1524
        %1723 = vst.msk [vmem:[%s474] sm:$0xff] %vm520, %v1722
        %v1724 = vld [vmem:[%s6] sm:$0xff]
        %v1725 = vld [vmem:[%s6 + $0x8] sm:$0xff]
        %v1727 = vsel %vm672, %v999, 0
        %1729 = vmatprep.subr.mxu0 0.0
        %1730 = vmatpush1.msra.mxu0 %v1724
        %1731 = vmatprep.subr.mxu0 0.0
        %1732 = vmatpush1.msra.mxu0 %v1725
        %1733 = vmatprep.subr.mxu0 0.0
        %1734 = vmatpush1.msra.mxu0 0.0
        %1735 = vmatprep.subr.mxu0 0.0
        %1736 = vmatpush1.msra.mxu0 0.0
        %1737 = vmatprep.subr.mxu0 0.0
        %1738 = vmatpush1.msra.mxu0 0.0
        %1739 = vmatprep.subr.mxu0 0.0
        %1740 = vmatpush1.msra.mxu0 0.0
        %1741 = vmatprep.subr.mxu0 0.0
        %1742 = vmatpush1.msra.mxu0 0.0
        %1743 = vmatprep.subr.mxu0 0.0
        %1744 = vmatpush1.msra.mxu0 0.0
        %1745 = vmatprep.subr.mxu0 0.0
        %1746 = vmatpush1.msra.mxu0 0.0
        %1747 = vmatprep.subr.mxu0 0.0
        %1748 = vmatpush1.msra.mxu0 0.0
        %1749 = vmatprep.subr.mxu0 0.0
        %1750 = vmatpush1.msra.mxu0 0.0
        %1751 = vmatprep.subr.mxu0 0.0
        %1752 = vmatpush1.msra.mxu0 0.0
        %1753 = vmatprep.subr.mxu0 0.0
        %1754 = vmatpush1.msra.mxu0 0.0
        %1755 = vmatprep.subr.mxu0 0.0
        %1756 = vmatpush1.msra.mxu0 0.0
        %1757 = vmatprep.subr.mxu0 0.0
        %1758 = vmatpush1.msra.mxu0 0.0
        %1759 = vmatprep.subr.mxu0 0.0
        %1760 = vmatpush1.msra.mxu0 0.0
        %1761 = vmatprep.subr.mxu0 0.0
        %1762 = vmatpush1.msra.mxu0 0.0
        %1763 = vmatprep.subr.mxu0 0.0
        %1764 = vmatpush1.msra.mxu0 0.0
        %1765 = vmatprep.subr.mxu0 0.0
        %1766 = vmatpush1.msra.mxu0 0.0
        %1767 = vmatprep.subr.mxu0 0.0
        %1768 = vmatpush1.msra.mxu0 0.0
        %1769 = vmatprep.subr.mxu0 0.0
        %1770 = vmatpush1.msra.mxu0 0.0
        %1771 = vmatprep.subr.mxu0 0.0
        %1772 = vmatpush1.msra.mxu0 0.0
        %1773 = vmatprep.subr.mxu0 0.0
        %1774 = vmatpush1.msra.mxu0 0.0
        %1775 = vmatprep.subr.mxu0 0.0
        %1776 = vmatpush1.msra.mxu0 0.0
        %1777 = vmatprep.subr.mxu0 0.0
        %1778 = vmatpush1.msra.mxu0 0.0
        %1779 = vmatprep.subr.mxu0 0.0
        %1780 = vmatpush1.msra.mxu0 0.0
        %1781 = vmatprep.subr.mxu0 0.0
        %1782 = vmatpush1.msra.mxu0 0.0
        %1783 = vmatprep.subr.mxu0 0.0
        %1784 = vmatpush1.msra.mxu0 0.0
        %1785 = vmatprep.subr.mxu0 0.0
        %1786 = vmatpush1.msra.mxu0 0.0
        %1787 = vmatprep.subr.mxu0 0.0
        %1788 = vmatpush1.msra.mxu0 0.0
        %1789 = vmatprep.subr.mxu0 0.0
        %1790 = vmatpush1.msra.mxu0 0.0
        %1791 = vmatprep.subr.mxu0 0.0
        %1792 = vmatpush1.msra.mxu0 0.0
        %1793 = vmatprep.mubr.f32.mxu0 0.0
        %1794 = vmatmul.mubr.f32.gmra.mrb[0].mxu0 %v1727
        %v1795 = vpop.f32.mrb[0].mxu0
        %v1796 = vadd.f32 0.0, %v1795
        %v1797 = vpop.f32.mrb[0].mxu0
        %1798 = vdwg.mxu0
        %v1799 = vadd.f32 %v1418, %v1796
        %v1800 = vld [vmem:[%s6 + $0x10] sm:$0xff]
        %v1801 = vld [vmem:[%s6 + $0x18] sm:$0xff]
        %v1803 = vsel %vm672, %v1331, 0
        %1805 = vmatprep.subr.mxu0 0.0
        %1806 = vmatpush1.msra.mxu0 %v1800
        %1807 = vmatprep.subr.mxu0 0.0
        %1808 = vmatpush1.msra.mxu0 %v1801
        %1809 = vmatprep.subr.mxu0 0.0
        %1810 = vmatpush1.msra.mxu0 0.0
        %1811 = vmatprep.subr.mxu0 0.0
        %1812 = vmatpush1.msra.mxu0 0.0
        %1813 = vmatprep.subr.mxu0 0.0
        %1814 = vmatpush1.msra.mxu0 0.0
        %1815 = vmatprep.subr.mxu0 0.0
        %1816 = vmatpush1.msra.mxu0 0.0
        %1817 = vmatprep.subr.mxu0 0.0
        %1818 = vmatpush1.msra.mxu0 0.0
        %1819 = vmatprep.subr.mxu0 0.0
        %1820 = vmatpush1.msra.mxu0 0.0
        %1821 = vmatprep.subr.mxu0 0.0
        %1822 = vmatpush1.msra.mxu0 0.0
        %1823 = vmatprep.subr.mxu0 0.0
        %1824 = vmatpush1.msra.mxu0 0.0
        %1825 = vmatprep.subr.mxu0 0.0
        %1826 = vmatpush1.msra.mxu0 0.0
        %1827 = vmatprep.subr.mxu0 0.0
        %1828 = vmatpush1.msra.mxu0 0.0
        %1829 = vmatprep.subr.mxu0 0.0
        %1830 = vmatpush1.msra.mxu0 0.0
        %1831 = vmatprep.subr.mxu0 0.0
        %1832 = vmatpush1.msra.mxu0 0.0
        %1833 = vmatprep.subr.mxu0 0.0
        %1834 = vmatpush1.msra.mxu0 0.0
        %1835 = vmatprep.subr.mxu0 0.0
        %1836 = vmatpush1.msra.mxu0 0.0
        %1837 = vmatprep.subr.mxu0 0.0
        %1838 = vmatpush1.msra.mxu0 0.0
        %1839 = vmatprep.subr.mxu0 0.0
        %1840 = vmatpush1.msra.mxu0 0.0
        %1841 = vmatprep.subr.mxu0 0.0
        %1842 = vmatpush1.msra.mxu0 0.0
        %1843 = vmatprep.subr.mxu0 0.0
        %1844 = vmatpush1.msra.mxu0 0.0
        %1845 = vmatprep.subr.mxu0 0.0
        %1846 = vmatpush1.msra.mxu0 0.0
        %1847 = vmatprep.subr.mxu0 0.0
        %1848 = vmatpush1.msra.mxu0 0.0
        %1849 = vmatprep.subr.mxu0 0.0
        %1850 = vmatpush1.msra.mxu0 0.0
        %1851 = vmatprep.subr.mxu0 0.0
        %1852 = vmatpush1.msra.mxu0 0.0
        %1853 = vmatprep.subr.mxu0 0.0
        %1854 = vmatpush1.msra.mxu0 0.0
        %1855 = vmatprep.subr.mxu0 0.0
        %1856 = vmatpush1.msra.mxu0 0.0
        %1857 = vmatprep.subr.mxu0 0.0
        %1858 = vmatpush1.msra.mxu0 0.0
        %1859 = vmatprep.subr.mxu0 0.0
        %1860 = vmatpush1.msra.mxu0 0.0
        %1861 = vmatprep.subr.mxu0 0.0
        %1862 = vmatpush1.msra.mxu0 0.0
        %1863 = vmatprep.subr.mxu0 0.0
        %1864 = vmatpush1.msra.mxu0 0.0
        %1865 = vmatprep.subr.mxu0 0.0
        %1866 = vmatpush1.msra.mxu0 0.0
        %1867 = vmatprep.subr.mxu0 0.0
        %1868 = vmatpush1.msra.mxu0 0.0
        %1869 = vmatprep.mubr.f32.mxu0 0.0
        %1870 = vmatmul.mubr.f32.gmra.mrb[0].mxu0 %v1803
        %v1871 = vpop.f32.mrb[0].mxu0
        %v1872 = vadd.f32 0.0, %v1871
        %v1873 = vpop.f32.mrb[0].mxu0
        %1874 = vdwg.mxu0
        %v1875 = vadd.f32 %v1799, %v1872
        %v1876 = vadd.f32 %v1875, %v506
        %v1877 = vsel %vm520, %v1876, 0.0
        %1878 = vadd.xlane.f32.xlu0 %v1877
        %v1879 = vpop.xlane.xlu0 %1878
        %v1880 = vmul.f32 %v1879, %v1500
        %v1881 = vsub.f32 %v1876, %v1880
        %v1882 = vmul.f32 %v1881, %v1881
        %v1883 = vsel %vm520, %v1882, 0.0
        %1884 = vadd.xlane.f32.xlu0 %v1883
        %v1885 = vpop.xlane.xlu0 %1884
        %v1886 = vmul.f32 %v1885, %v1500
        %v1887 = vadd.f32 %v1886, 1e-05
        %v1888 = vrsqrt.pop %v1887
        %v1889 = vmul.f32 %v1881, %v1888
        %v1890 = vmul.f32 %v1889, %v1514
        %v1891 = vadd.f32 %v1890, %v1519
        %1893 = vset.pattern.permute.xlu0 0
        %1894 = vperm.xlu0 %1893, %v508
        %v1895 = vpop.permute.xlu0 %1894
        %v1897 = vmul.f32 %v1891, %v1895
        %v1898 = vld [vmem:[%s8] sm:$0xff]
        %v1899 = vld [vmem:[%s8 + $0x8] sm:$0xff]
        %v1900 = vld [vmem:[%s8 + $0x10] sm:$0xff]
        %v1901 = vld [vmem:[%s8 + $0x18] sm:$0xff]
        %v1902 = vld [vmem:[%s9] sm:$0x1]
        %v1904 = vlaneseq
        %v1905 = vshrl.u32 %v1904, 7
        %v1906 = vsub.s32 0, %v1905
        %v1907 = vrot.slane %v1902, %v1906
        %v1910 = vsel %vm520, %v1897, 0
        %1912 = vmatprep.subr.mxu0 0.0
        %1913 = vmatpush1.msra.mxu0 %v1898
        %1914 = vmatprep.subr.mxu0 0.0
        %1915 = vmatpush1.msra.mxu0 %v1899
        %1916 = vmatprep.subr.mxu0 0.0
        %1917 = vmatpush1.msra.mxu0 %v1900
        %1918 = vmatprep.subr.mxu0 0.0
        %1919 = vmatpush1.msra.mxu0 %v1901
        %1920 = vmatprep.subr.mxu0 0.0
        %1921 = vmatpush1.msra.mxu0 0.0
        %1922 = vmatprep.subr.mxu0 0.0
        %1923 = vmatpush1.msra.mxu0 0.0
        %1924 = vmatprep.subr.mxu0 0.0
        %1925 = vmatpush1.msra.mxu0 0.0
        %1926 = vmatprep.subr.mxu0 0.0
        %1927 = vmatpush1.msra.mxu0 0.0
        %1928 = vmatprep.subr.mxu0 0.0
        %1929 = vmatpush1.msra.mxu0 0.0
        %1930 = vmatprep.subr.mxu0 0.0
        %1931 = vmatpush1.msra.mxu0 0.0
        %1932 = vmatprep.subr.mxu0 0.0
        %1933 = vmatpush1.msra.mxu0 0.0
        %1934 = vmatprep.subr.mxu0 0.0
        %1935 = vmatpush1.msra.mxu0 0.0
        %1936 = vmatprep.subr.mxu0 0.0
        %1937 = vmatpush1.msra.mxu0 0.0
        %1938 = vmatprep.subr.mxu0 0.0
        %1939 = vmatpush1.msra.mxu0 0.0
        %1940 = vmatprep.subr.mxu0 0.0
        %1941 = vmatpush1.msra.mxu0 0.0
        %1942 = vmatprep.subr.mxu0 0.0
        %1943 = vmatpush1.msra.mxu0 0.0
        %1944 = vmatprep.subr.mxu0 0.0
        %1945 = vmatpush1.msra.mxu0 0.0
        %1946 = vmatprep.subr.mxu0 0.0
        %1947 = vmatpush1.msra.mxu0 0.0
        %1948 = vmatprep.subr.mxu0 0.0
        %1949 = vmatpush1.msra.mxu0 0.0
        %1950 = vmatprep.subr.mxu0 0.0
        %1951 = vmatpush1.msra.mxu0 0.0
        %1952 = vmatprep.subr.mxu0 0.0
        %1953 = vmatpush1.msra.mxu0 0.0
        %1954 = vmatprep.subr.mxu0 0.0
        %1955 = vmatpush1.msra.mxu0 0.0
        %1956 = vmatprep.subr.mxu0 0.0
        %1957 = vmatpush1.msra.mxu0 0.0
        %1958 = vmatprep.subr.mxu0 0.0
        %1959 = vmatpush1.msra.mxu0 0.0
        %1960 = vmatprep.subr.mxu0 0.0
        %1961 = vmatpush1.msra.mxu0 0.0
        %1962 = vmatprep.subr.mxu0 0.0
        %1963 = vmatpush1.msra.mxu0 0.0
        %1964 = vmatprep.subr.mxu0 0.0
        %1965 = vmatpush1.msra.mxu0 0.0
        %1966 = vmatprep.subr.mxu0 0.0
        %1967 = vmatpush1.msra.mxu0 0.0
        %1968 = vmatprep.subr.mxu0 0.0
        %1969 = vmatpush1.msra.mxu0 0.0
        %1970 = vmatprep.subr.mxu0 0.0
        %1971 = vmatpush1.msra.mxu0 0.0
        %1972 = vmatprep.subr.mxu0 0.0
        %1973 = vmatpush1.msra.mxu0 0.0
        %1974 = vmatprep.subr.mxu0 0.0
        %1975 = vmatpush1.msra.mxu0 0.0
        %1976 = vmatprep.mubr.f32.mxu0 0.0
        %1977 = vmatmul.mubr.f32.gmra.mrb[0].mxu0 %v1910
        %v1978 = vpop.f32.mrb[0].mxu0
        %v1979 = vadd.f32 %v1907, %v1978
        %v1980 = vpop.f32.mrb[0].mxu0
        %1981 = vdwg.mxu0
        %v1982 = vmax.f32 %v1979, 0.0
        %v1983 = vld [vmem:[%s10] sm:$0xff]
        %v1984 = vld [vmem:[%s10 + $0x8] sm:$0xff]
        %v1985 = vld [vmem:[%s10 + $0x10] sm:$0xff]
        %v1986 = vld [vmem:[%s10 + $0x18] sm:$0xff]
        %v1987 = vld [vmem:[%s10 + $0x20] sm:$0xff]
        %v1988 = vld [vmem:[%s10 + $0x28] sm:$0xff]
        %v1989 = vld [vmem:[%s10 + $0x30] sm:$0xff]
        %v1990 = vld [vmem:[%s10 + $0x38] sm:$0xff]
        %v1992 = vsel %vm1624, %v1982, 0
        %1994 = vmatprep.subr.mxu0 0.0
        %1995 = vmatpush1.msra.mxu0 %v1983
        %1996 = vmatprep.subr.mxu0 0.0
        %1997 = vmatpush1.msra.mxu0 %v1984
        %1998 = vmatprep.subr.mxu0 0.0
        %1999 = vmatpush1.msra.mxu0 %v1985
        %2000 = vmatprep.subr.mxu0 0.0
        %2001 = vmatpush1.msra.mxu0 %v1986
        %2002 = vmatprep.subr.mxu0 0.0
        %2003 = vmatpush1.msra.mxu0 %v1987
        %2004 = vmatprep.subr.mxu0 0.0
        %2005 = vmatpush1.msra.mxu0 %v1988
        %2006 = vmatprep.subr.mxu0 0.0
        %2007 = vmatpush1.msra.mxu0 %v1989
        %2008 = vmatprep.subr.mxu0 0.0
        %2009 = vmatpush1.msra.mxu0 %v1990
        %2010 = vmatprep.subr.mxu0 0.0
        %2011 = vmatpush1.msra.mxu0 0.0
        %2012 = vmatprep.subr.mxu0 0.0
        %2013 = vmatpush1.msra.mxu0 0.0
        %2014 = vmatprep.subr.mxu0 0.0
        %2015 = vmatpush1.msra.mxu0 0.0
        %2016 = vmatprep.subr.mxu0 0.0
        %2017 = vmatpush1.msra.mxu0 0.0
        %2018 = vmatprep.subr.mxu0 0.0
        %2019 = vmatpush1.msra.mxu0 0.0
        %2020 = vmatprep.subr.mxu0 0.0
        %2021 = vmatpush1.msra.mxu0 0.0
        %2022 = vmatprep.subr.mxu0 0.0
        %2023 = vmatpush1.msra.mxu0 0.0
        %2024 = vmatprep.subr.mxu0 0.0
        %2025 = vmatpush1.msra.mxu0 0.0
        %2026 = vmatprep.subr.mxu0 0.0
        %2027 = vmatpush1.msra.mxu0 0.0
        %2028 = vmatprep.subr.mxu0 0.0
        %2029 = vmatpush1.msra.mxu0 0.0
        %2030 = vmatprep.subr.mxu0 0.0
        %2031 = vmatpush1.msra.mxu0 0.0
        %2032 = vmatprep.subr.mxu0 0.0
        %2033 = vmatpush1.msra.mxu0 0.0
        %2034 = vmatprep.subr.mxu0 0.0
        %2035 = vmatpush1.msra.mxu0 0.0
        %2036 = vmatprep.subr.mxu0 0.0
        %2037 = vmatpush1.msra.mxu0 0.0
        %2038 = vmatprep.subr.mxu0 0.0
        %2039 = vmatpush1.msra.mxu0 0.0
        %2040 = vmatprep.subr.mxu0 0.0
        %2041 = vmatpush1.msra.mxu0 0.0
        %2042 = vmatprep.subr.mxu0 0.0
        %2043 = vmatpush1.msra.mxu0 0.0
        %2044 = vmatprep.subr.mxu0 0.0
        %2045 = vmatpush1.msra.mxu0 0.0
        %2046 = vmatprep.subr.mxu0 0.0
        %2047 = vmatpush1.msra.mxu0 0.0
        %2048 = vmatprep.subr.mxu0 0.0
        %2049 = vmatpush1.msra.mxu0 0.0
        %2050 = vmatprep.subr.mxu0 0.0
        %2051 = vmatpush1.msra.mxu0 0.0
        %2052 = vmatprep.subr.mxu0 0.0
        %2053 = vmatpush1.msra.mxu0 0.0
        %2054 = vmatprep.subr.mxu0 0.0
        %2055 = vmatpush1.msra.mxu0 0.0
        %2056 = vmatprep.subr.mxu0 0.0
        %2057 = vmatpush1.msra.mxu0 0.0
        %2058 = vmatprep.mubr.f32.mxu0 0.0
        %2059 = vmatmul.mubr.f32.gmra.mrb[0].mxu0 %v1992
        %v2060 = vpop.f32.mrb[0].mxu0
        %v2061 = vadd.f32 %v1623, %v2060
        %v2062 = vpop.f32.mrb[0].mxu0
        %2063 = vdwg.mxu0
        %v2064 = vadd.f32 %v2061, %v1897
        %v2065 = vsel %vm520, %v2064, 0.0
        %2066 = vadd.xlane.f32.xlu0 %v2065
        %v2067 = vpop.xlane.xlu0 %2066
        %v2068 = vmul.f32 %v2067, %v1500
        %v2069 = vsub.f32 %v2064, %v2068
        %v2070 = vmul.f32 %v2069, %v2069
        %v2071 = vsel %vm520, %v2070, 0.0
        %2072 = vadd.xlane.f32.xlu0 %v2071
        %v2073 = vpop.xlane.xlu0 %2072
        %v2074 = vmul.f32 %v2073, %v1500
        %v2075 = vadd.f32 %v2074, 1e-05
        %v2076 = vrsqrt.pop %v2075
        %v2077 = vmul.f32 %v2069, %v2076
        %v2078 = vmul.f32 %v2077, %v1715
        %v2079 = vadd.f32 %v2078, %v1720
        %v2080 = vmul.f32 %v2079, %v1895
        %2081 = vst.msk [vmem:[%s481] sm:$0xff] %vm520, %v2080
        %s2082 = sand.u32 %s290, 1
        %s2083 = scalar_lea.sflag [#allocation3], %s2082
        %s2084 = sand.u32 %s290, 1
        %s2085 = smul.addr %s2084, 8
        %s2086 = scalar_lea.vmem [#allocation2], %s2085
        %s2087 = sand.u32 %s31, 1
        %s2088 = scalar_lea.sflag [#allocation5], %s2087
        %s2089 = sand.u32 %s316, 1
        %s2090 = smul.addr %s2089, 8
        %s2091 = scalar_lea.vmem [#allocation4], %s2090
        %s2092 = sand.u32 %s31, 1
        %s2093 = scalar_lea.sflag [#allocation5], %s2092
        %s2094 = sand.u32 %s342, 1
        %s2095 = smul.addr %s2094, 16
        %s2096 = scalar_lea.vmem [#allocation6], %s2095
        // Predicated region
        $region65: #{cross_graph_encoder_layer.1} parent=63 // pred_check
          %p2097 = pneg %p300
        $region66: #{cross_graph_encoder_layer.1} parent=63 // pred_check_branch
          %2099 = sbr.rel (%p2097) target = $region68
        $region67: #{cross_graph_encoder_layer.1} parent=63 // pred_region
          %s2101 = ssub.s32 128, 128
          %2102 = vsyncadd %s2083, %s2101
          %s2103 = smul.addr %s31, 128
          %s2104 = scalar_lea.hbm %s11, %s2103
          %s2106 = sshll.u32 %s2086, 4
          %s2107 = int_to_ptr.vmem [resolvable:$true] %s2106
          %2109 = dma.vmem_to_hbm [thread:$0]  %s2107, 128, %s2104, %s2083
        $region68: #{cross_graph_encoder_layer.1} parent=63 // pred_fallthru
          _
        // Predicated region
        $region69: #{cross_graph_encoder_layer.1} parent=63 // pred_check
          %p2110 = pneg %p326
        $region70: #{cross_graph_encoder_layer.1} parent=63 // pred_check_branch
          %2112 = sbr.rel (%p2110) target = $region72
        $region71: #{cross_graph_encoder_layer.1} parent=63 // pred_region
          %s2114 = ssub.s32 128, 128
          %2115 = vsyncadd %s2088, %s2114
          %s2116 = smul.addr %s31, 128
          %s2117 = scalar_lea.hbm %s12, %s2116
          %s2119 = sshll.u32 %s2091, 4
          %s2120 = int_to_ptr.vmem [resolvable:$true] %s2119
          %2122 = dma.vmem_to_hbm [thread:$0]  %s2120, 128, %s2117, %s2088
        $region72: #{cross_graph_encoder_layer.1} parent=63 // pred_fallthru
          _
        // Predicated region
        $region73: #{cross_graph_encoder_layer.1} parent=63 // pred_check
          %p2123 = pneg %p352
        $region74: #{cross_graph_encoder_layer.1} parent=63 // pred_check_branch
          %2125 = sbr.rel (%p2123) target = $region76
        $region75: #{cross_graph_encoder_layer.1} parent=63 // pred_region
          %s2127 = ssub.s32 256, 256
          %2128 = vsyncadd %s2093, %s2127
          %s2129 = smul.addr %s31, 128
          %s2130 = scalar_lea.hbm %s13, %s2129
          %s2131 = sshll.u32 %s2096, 4
          %s2132 = int_to_ptr.vmem [resolvable:$true] %s2131
          %2137 = dma.vmem_to_hbm [thread:$0]  %s2132, 256, %s2130, %s2093, 128, 256, 8
        $region76: #{cross_graph_encoder_layer.1} parent=63 // pred_fallthru
          _
      $region64: #{cross_graph_encoder_layer.1} parent=5 // pred_fallthru
        _
      %p2138 = scmp.le.s32.totalorder 2, %s26
      // Predicated region
      $region77: #{cross_graph_encoder_layer.1} parent=5 // pred_check
        %p2139 = pneg %p2138
      $region78: #{cross_graph_encoder_layer.1} parent=5 // pred_check_branch
        %2141 = sbr.rel (%p2139) target = $region80
      $region79: #{cross_graph_encoder_layer.1} parent=5 // pred_region
        %s2142 = ssub.s32 %s26, 2
        // Predicated region
        $region81: #{cross_graph_encoder_layer.1} parent=79 // pred_check
          %p2143 = pneg %p306
        $region82: #{cross_graph_encoder_layer.1} parent=79 // pred_check_branch
          %2145 = sbr.rel (%p2143) target = $region84
        $region83: #{cross_graph_encoder_layer.1} parent=79 // pred_region
          %s2146 = sand.u32 %s291, 1
          %s2147 = scalar_lea.sflag [#allocation3], %s2146
          %s2148 = sand.u32 %s291, 1
          %s2149 = smul.addr %s2148, 8
          %s2150 = scalar_lea.vmem [#allocation2], %s2149
          %2151 = dma.done %s2147, 128
        $region84: #{cross_graph_encoder_layer.1} parent=79 // pred_fallthru
          _
        // Predicated region
        $region85: #{cross_graph_encoder_layer.1} parent=79 // pred_check
          %p2152 = pneg %p332
        $region86: #{cross_graph_encoder_layer.1} parent=79 // pred_check_branch
          %2154 = sbr.rel (%p2152) target = $region88
        $region87: #{cross_graph_encoder_layer.1} parent=79 // pred_region
          %s2155 = sand.u32 %s32, 1
          %s2156 = scalar_lea.sflag [#allocation5], %s2155
          %s2157 = sand.u32 %s317, 1
          %s2158 = smul.addr %s2157, 8
          %s2159 = scalar_lea.vmem [#allocation4], %s2158
          %2160 = dma.done %s2156, 128
        $region88: #{cross_graph_encoder_layer.1} parent=79 // pred_fallthru
          _
        // Predicated region
        $region89: #{cross_graph_encoder_layer.1} parent=79 // pred_check
          %p2161 = pneg %p358
        $region90: #{cross_graph_encoder_layer.1} parent=79 // pred_check_branch
          %2163 = sbr.rel (%p2161) target = $region92
        $region91: #{cross_graph_encoder_layer.1} parent=79 // pred_region
          %s2164 = sand.u32 %s32, 1
          %s2165 = scalar_lea.sflag [#allocation5], %s2164
          %s2166 = sand.u32 %s343, 1
          %s2167 = smul.addr %s2166, 16
          %s2168 = scalar_lea.vmem [#allocation6], %s2167
          %2169 = dma.done %s2165, 256
        $region92: #{cross_graph_encoder_layer.1} parent=79 // pred_fallthru
          _
      $region80: #{cross_graph_encoder_layer.1} parent=5 // pred_fallthru
        _
    $region6: #{cross_graph_encoder_layer.1} parent=1 // loop_footer
      %s30 = sadd.s32 1, %s26
    $region7: #{cross_graph_encoder_layer.1} parent=1 // loop_footer_branch
      %25 = sbr.rel target = $region3
    $region8: #{cross_graph_encoder_layer.1} parent=1 // loop_exit
      _
    %2170 = vsyncpa [#allocation3], 1
    %s2171 = scalar_lea.sflag [#allocation3], 1
    %2172 = vsyncpa %s2171, 1
    %2173 = vsyncpa [#allocation5], 1
    %s2174 = scalar_lea.sflag [#allocation5], 1
    %2175 = vsyncpa %s2174, 1

</llo_original>
